<compile_context>
chip_gen: v7x
topology: tpu7x:2x2x1
jax: 0.10.0
libtpu: 0.0.40
codegen_flags: <defaults>
</compile_context>

<pallas_src>
import functools

import jax
import jax.numpy as jnp
import numpy as np
from jax.experimental import pallas as pl
from jax.experimental.pallas import tpu as pltpu


def _round_up(x, m):
    return (x + m - 1) // m * m


def gru_recurrent_kernel(gi_ref, whh_ref, bhh_ref, y_ref, h_scratch):
    """Serial GRU recurrence over one time block.

    gi_ref:    (Tt, Bp, 3*Hp)  precomputed x @ W_ih^T + b_ih (gate-blocked, padded)
    whh_ref:   (Hp, 3*Hp)      recurrent weight, pre-transposed & gate-blocked
    bhh_ref:   (1, 3*Hp)       recurrent bias, gate-blocked
    y_ref:     (Tt, Bp, Hp)    output hidden states for this time block
    h_scratch: (Bp, Hp) f32    hidden state, persistent across grid steps
    """
    Hp = h_scratch.shape[-1]
    Tt = y_ref.shape[0]

    @pl.when(pl.program_id(0) == 0)
    def _():
        h_scratch[...] = jnp.zeros_like(h_scratch)

    w = whh_ref[...]          # (Hp, 3Hp), loop-invariant, loaded once
    b = bhh_ref[...]          # (1, 3Hp)
    h = h_scratch[...]        # (Bp, Hp)

    # Fully unrolled serial recurrence (Tt is a static block size, so all ref
    # indices are static and the LLO scheduler sees the whole chain).
    for t in range(Tt):
        gi = gi_ref[t]                                             # (Bp, 3Hp)
        gh = jnp.dot(h, w, preferred_element_type=jnp.float32) + b  # (Bp, 3Hp)
        r = jax.nn.sigmoid(gi[:, 0:Hp] + gh[:, 0:Hp])
        z = jax.nn.sigmoid(gi[:, Hp:2 * Hp] + gh[:, Hp:2 * Hp])
        n = jnp.tanh(gi[:, 2 * Hp:3 * Hp] + r * gh[:, 2 * Hp:3 * Hp])
        h = (1.0 - z) * n + z * h
        y_ref[t] = h.astype(y_ref.dtype)

    h_scratch[...] = h


@functools.partial(jax.jit, static_argnames=("time_block",))
def cudnn_gru_forward(x, w_ih, w_hh, b_ih, b_hh, *, time_block=16):
    """x: (T, B, insize) f32.  Weights in PyTorch GRU layout:
       w_ih (3H, insize), w_hh (3H, H), b_ih (3H,), b_hh (3H,).
       Returns y: (T, B, H) f32."""
    T, B, insize = x.shape
    H = w_hh.shape[1]

    Hp = _round_up(H, 128)          # lane-align each gate slab
    Bp = _round_up(B, 8)            # sublane-align batch
    Tt = min(time_block, T)         # timesteps per grid step
    Tp = _round_up(T, Tt)

    # --- Gate-blocked, padded, pre-transposed parameters -------------------
    # Each gate g in (r, z, n) occupies lanes [g*Hp, g*Hp + H); padded lanes
    # are zero so the padded part of the hidden state stays identically zero.
    w_ih_t = jnp.zeros((insize, 3 * Hp), jnp.float32)
    w_hh_t = jnp.zeros((Hp, 3 * Hp), jnp.float32)
    b_ih_p = jnp.zeros((3 * Hp,), jnp.float32)
    b_hh_p = jnp.zeros((3 * Hp,), jnp.float32)
    for g in range(3):
        w_ih_t = w_ih_t.at[:, g * Hp:g * Hp + H].set(w_ih[g * H:(g + 1) * H, :].T)
        w_hh_t = w_hh_t.at[:H, g * Hp:g * Hp + H].set(w_hh[g * H:(g + 1) * H, :].T)
        b_ih_p = b_ih_p.at[g * Hp:g * Hp + H].set(b_ih[g * H:(g + 1) * H])
        b_hh_p = b_hh_p.at[g * Hp:g * Hp + H].set(b_hh[g * H:(g + 1) * H])
    b_hh_p = b_hh_p.reshape(1, 3 * Hp)

    # --- Hoisted input projection (fully parallel, outside the recurrence) --
    gi = (x.reshape(T * B, insize).astype(jnp.float32) @ w_ih_t + b_ih_p)
    gi = gi.reshape(T, B, 3 * Hp)
    # Pad batch and time (padded timesteps sit at the end; their outputs are
    # sliced away and never feed back into real timesteps).
    gi = jnp.pad(gi, ((0, Tp - T), (0, Bp - B), (0, 0)))

    # --- Serial recurrence kernel -------------------------------------------
    y_p = pl.pallas_call(
        gru_recurrent_kernel,
        out_shape=jax.ShapeDtypeStruct((Tp, Bp, Hp), x.dtype),
        grid_spec=pltpu.PrefetchScalarGridSpec(
            num_scalar_prefetch=0,
            grid=(Tp // Tt,),
            in_specs=[
                pl.BlockSpec((Tt, Bp, 3 * Hp), lambda tc: (tc, 0, 0)),
                pl.BlockSpec((Hp, 3 * Hp), lambda tc: (0, 0)),
                pl.BlockSpec((1, 3 * Hp), lambda tc: (0, 0)),
            ],
            out_specs=pl.BlockSpec((Tt, Bp, Hp), lambda tc: (tc, 0, 0)),
            scratch_shapes=[pltpu.VMEM((Bp, Hp), jnp.float32)],
        ),
        compiler_params=pltpu.CompilerParams(
            dimension_semantics=("arbitrary",),   # time recurrence is serial
        ),
    )(gi, w_hh_t, b_hh_p)

    return y_p[:T, :B, :H]


def gru_reference(x, w_ih, w_hh, b_ih, b_hh):
    """Pure-JAX reference: PyTorch nn.GRU equations (gate order r, z, n)."""
    T, B, _ = x.shape
    H = w_hh.shape[1]

    def step(h, x_t):
        gi = x_t @ w_ih.T + b_ih
        gh = h @ w_hh.T + b_hh
        r = jax.nn.sigmoid(gi[:, :H] + gh[:, :H])
        z = jax.nn.sigmoid(gi[:, H:2 * H] + gh[:, H:2 * H])
        n = jnp.tanh(gi[:, 2 * H:] + r * gh[:, 2 * H:])
        h_new = (1.0 - z) * n + z * h
        return h_new, h_new

    h0 = jnp.zeros((B, H), jnp.float32)
    _, ys = jax.lax.scan(step, h0, x)
    return ys


def init_params(key, insize, size):
    """Deterministic init mirroring CudnnGru.reset_parameters
    (truncnorm(-2,2)*sd, scaled for the weight matrices)."""
    k1, k2, k3, k4 = jax.random.split(key, 4)
    sd = 0.5
    w_ih = sd * jax.random.truncated_normal(
        k1, -2.0, 2.0, (3 * size, insize), jnp.float32) / np.sqrt(insize + size)
    w_hh = sd * jax.random.truncated_normal(
        k2, -2.0, 2.0, (3 * size, size), jnp.float32) / np.sqrt(2 * size)
    b_ih = sd * jax.random.truncated_normal(k3, -2.0, 2.0, (3 * size,), jnp.float32)
    b_hh = sd * jax.random.truncated_normal(k4, -2.0, 2.0, (3 * size,), jnp.float32)
    return w_ih, w_hh, b_ih, b_hh


if __name__ == "__main__":
    T, B, insize, size = 8, 2, 16, 32

    key = jax.random.PRNGKey(0)
    kx, kp = jax.random.split(key)
    x = jax.random.normal(kx, (T, B, insize), jnp.float32)
    w_ih, w_hh, b_ih, b_hh = init_params(kp, insize, size)

    y = cudnn_gru_forward(x, w_ih, w_hh, b_ih, b_hh)
    y = jax.block_until_ready(y)

    y_ref = jax.block_until_ready(gru_reference(x, w_ih, w_hh, b_ih, b_hh))
    np.testing.assert_allclose(np.asarray(y), np.asarray(y_ref), atol=1e-5, rtol=1e-5)

    print("KERNEL_OK")
</pallas_src>

<mosaic_0001>
module attributes {stable_mosaic.version = 11 : i64} {
  func.func @gru_recurrent_kernel(%arg0: i32, %arg1: memref<8x8x384xf32, #tpu.memory_space<vmem>>, %arg2: memref<128x384xf32, #tpu.memory_space<vmem>>, %arg3: memref<1x384xf32, #tpu.memory_space<vmem>>, %arg4: memref<8x8x128xf32, #tpu.memory_space<vmem>>, %arg5: memref<8x128xf32, #tpu.memory_space<vmem>>) attributes {dimension_semantics = [#tpu.dimension_semantics<arbitrary>], iteration_bounds = array<i64: 1>, scalar_prefetch = 0 : i64, scratch_operands = 1 : i64, tpu.core_type = #tpu.core_type<tc>, window_params = [{transform_indices = @transform_0, window_bounds = array<i64: 8, 8, 384>}, {pipeline_mode = #tpu.pipeline_mode<synchronous>, transform_indices = @transform_1, window_bounds = array<i64: 128, 384>}, {pipeline_mode = #tpu.pipeline_mode<synchronous>, transform_indices = @transform_2, window_bounds = array<i64: 1, 384>}, {transform_indices = @transform_3, window_bounds = array<i64: 8, 8, 128>}]} {
    %c0_i32 = arith.constant 0 : i32
    %0 = arith.cmpi eq, %arg0, %c0_i32 : i32
    %1 = arith.extui %0 : i1 to i32
    %c0_i32_0 = arith.constant 0 : i32
    %2 = arith.cmpi ne, %1, %c0_i32_0 : i32
    scf.if %2 {
      %cst_80 = arith.constant 0.000000e+00 : f32
      %279 = vector.broadcast %cst_80 : f32 to vector<8x128xf32>
      %c0_81 = arith.constant 0 : index
      %c0_82 = arith.constant 0 : index
      %280 = vector.load %arg5[%c0_81, %c0_82] : memref<8x128xf32, #tpu.memory_space<vmem>>, vector<8x128xf32>
      tpu.vector_store %arg5[%c0_81, %c0_82], %279 {strides = array<i32>} : memref<8x128xf32, #tpu.memory_space<vmem>>, vector<8x128xf32>,
    } else {
    }
    %c0 = arith.constant 0 : index
    %c0_1 = arith.constant 0 : index
    %3 = vector.load %arg2[%c0, %c0_1] : memref<128x384xf32, #tpu.memory_space<vmem>>, vector<128x384xf32>
    %c0_2 = arith.constant 0 : index
    %c0_3 = arith.constant 0 : index
    %4 = vector.load %arg3[%c0_2, %c0_3] : memref<1x384xf32, #tpu.memory_space<vmem>>, vector<1x384xf32>
    %c0_4 = arith.constant 0 : index
    %c0_5 = arith.constant 0 : index
    %5 = vector.load %arg5[%c0_4, %c0_5] : memref<8x128xf32, #tpu.memory_space<vmem>>, vector<8x128xf32>
    %c0_6 = arith.constant 0 : index
    %c0_7 = arith.constant 0 : index
    %c0_8 = arith.constant 0 : index
    %6 = vector.load %arg1[%c0_6, %c0_7, %c0_8] : memref<8x8x384xf32, #tpu.memory_space<vmem>>, vector<1x8x384xf32>
    %7 = vector.shape_cast %6 : vector<1x8x384xf32> to vector<8x384xf32>
    %cst = arith.constant dense<0.000000e+00> : vector<8x384xf32>
    %8 = tpu.matmul %5, %3, %cst {dimension_numbers = #tpu.dot_dimension_numbers<[1], [0], [0], [1], [0, 0, 1, 1], [], []>} : vector<8x128xf32>, vector<128x384xf32>, vector<8x384xf32> -> vector<8x384xf32>
    %9 = vector.broadcast %4 : vector<1x384xf32> to vector<8x384xf32>
    %10 = arith.addf %8, %9 : vector<8x384xf32>
    %11 = vector.extract_strided_slice %7 {offsets = [0, 0], sizes = [8, 128], strides = [1, 1]} : vector<8x384xf32> to vector<8x128xf32>
    %12 = vector.extract_strided_slice %10 {offsets = [0, 0], sizes = [8, 128], strides = [1, 1]} : vector<8x384xf32> to vector<8x128xf32>
    %13 = arith.addf %11, %12 : vector<8x128xf32>
    %14 = arith.negf %13 : vector<8x128xf32>
    %15 = math.exp %14 : vector<8x128xf32>
    %cst_9 = arith.constant 1.000000e+00 : f32
    %16 = vector.broadcast %cst_9 : f32 to vector<8x128xf32>
    %17 = arith.addf %16, %15 : vector<8x128xf32>
    %18 = arith.divf %16, %17 : vector<8x128xf32>
    %19 = vector.extract_strided_slice %7 {offsets = [0, 128], sizes = [8, 128], strides = [1, 1]} : vector<8x384xf32> to vector<8x128xf32>
    %20 = vector.extract_strided_slice %10 {offsets = [0, 128], sizes = [8, 128], strides = [1, 1]} : vector<8x384xf32> to vector<8x128xf32>
    %21 = arith.addf %19, %20 : vector<8x128xf32>
    %22 = arith.negf %21 : vector<8x128xf32>
    %23 = math.exp %22 : vector<8x128xf32>
    %cst_10 = arith.constant 1.000000e+00 : f32
    %24 = vector.broadcast %cst_10 : f32 to vector<8x128xf32>
    %25 = arith.addf %24, %23 : vector<8x128xf32>
    %26 = arith.divf %24, %25 : vector<8x128xf32>
    %27 = vector.extract_strided_slice %7 {offsets = [0, 256], sizes = [8, 128], strides = [1, 1]} : vector<8x384xf32> to vector<8x128xf32>
    %28 = vector.extract_strided_slice %10 {offsets = [0, 256], sizes = [8, 128], strides = [1, 1]} : vector<8x384xf32> to vector<8x128xf32>
    %29 = arith.mulf %18, %28 : vector<8x128xf32>
    %30 = arith.addf %27, %29 : vector<8x128xf32>
    %31 = math.tanh %30 : vector<8x128xf32>
    %cst_11 = arith.constant 1.000000e+00 : f32
    %32 = vector.broadcast %cst_11 : f32 to vector<8x128xf32>
    %33 = arith.subf %32, %26 : vector<8x128xf32>
    %34 = arith.mulf %33, %31 : vector<8x128xf32>
    %35 = arith.mulf %26, %5 : vector<8x128xf32>
    %36 = arith.addf %34, %35 : vector<8x128xf32>
    %c0_12 = arith.constant 0 : index
    %c0_13 = arith.constant 0 : index
    %c0_14 = arith.constant 0 : index
    %37 = vector.load %arg4[%c0_12, %c0_13, %c0_14] : memref<8x8x128xf32, #tpu.memory_space<vmem>>, vector<1x8x128xf32>
    %38 = vector.shape_cast %37 : vector<1x8x128xf32> to vector<8x128xf32>
    %39 = vector.shape_cast %36 : vector<8x128xf32> to vector<1x8x128xf32>
    tpu.vector_store %arg4[%c0_12, %c0_13, %c0_14], %39 {strides = array<i32>} : memref<8x8x128xf32, #tpu.memory_space<vmem>>, vector<1x8x128xf32>,
    %c1 = arith.constant 1 : index
    %c0_15 = arith.constant 0 : index
    %c0_16 = arith.constant 0 : index
    %40 = vector.load %arg1[%c1, %c0_15, %c0_16] : memref<8x8x384xf32, #tpu.memory_space<vmem>>, vector<1x8x384xf32>
    %41 = vector.shape_cast %40 : vector<1x8x384xf32> to vector<8x384xf32>
    %cst_17 = arith.constant dense<0.000000e+00> : vector<8x384xf32>
    %42 = tpu.matmul %36, %3, %cst_17 {dimension_numbers = #tpu.dot_dimension_numbers<[1], [0], [0], [1], [0, 0, 1, 1], [], []>} : vector<8x128xf32>, vector<128x384xf32>, vector<8x384xf32> -> vector<8x384xf32>
    %43 = vector.broadcast %4 : vector<1x384xf32> to vector<8x384xf32>
    %44 = arith.addf %42, %43 : vector<8x384xf32>
    %45 = vector.extract_strided_slice %41 {offsets = [0, 0], sizes = [8, 128], strides = [1, 1]} : vector<8x384xf32> to vector<8x128xf32>
    %46 = vector.extract_strided_slice %44 {offsets = [0, 0], sizes = [8, 128], strides = [1, 1]} : vector<8x384xf32> to vector<8x128xf32>
    %47 = arith.addf %45, %46 : vector<8x128xf32>
    %48 = arith.negf %47 : vector<8x128xf32>
    %49 = math.exp %48 : vector<8x128xf32>
    %cst_18 = arith.constant 1.000000e+00 : f32
    %50 = vector.broadcast %cst_18 : f32 to vector<8x128xf32>
    %51 = arith.addf %50, %49 : vector<8x128xf32>
    %52 = arith.divf %50, %51 : vector<8x128xf32>
    %53 = vector.extract_strided_slice %41 {offsets = [0, 128], sizes = [8, 128], strides = [1, 1]} : vector<8x384xf32> to vector<8x128xf32>
    %54 = vector.extract_strided_slice %44 {offsets = [0, 128], sizes = [8, 128], strides = [1, 1]} : vector<8x384xf32> to vector<8x128xf32>
    %55 = arith.addf %53, %54 : vector<8x128xf32>
    %56 = arith.negf %55 : vector<8x128xf32>
    %57 = math.exp %56 : vector<8x128xf32>
    %cst_19 = arith.constant 1.000000e+00 : f32
    %58 = vector.broadcast %cst_19 : f32 to vector<8x128xf32>
    %59 = arith.addf %58, %57 : vector<8x128xf32>
    %60 = arith.divf %58, %59 : vector<8x128xf32>
    %61 = vector.extract_strided_slice %41 {offsets = [0, 256], sizes = [8, 128], strides = [1, 1]} : vector<8x384xf32> to vector<8x128xf32>
    %62 = vector.extract_strided_slice %44 {offsets = [0, 256], sizes = [8, 128], strides = [1, 1]} : vector<8x384xf32> to vector<8x128xf32>
    %63 = arith.mulf %52, %62 : vector<8x128xf32>
    %64 = arith.addf %61, %63 : vector<8x128xf32>
    %65 = math.tanh %64 : vector<8x128xf32>
    %cst_20 = arith.constant 1.000000e+00 : f32
    %66 = vector.broadcast %cst_20 : f32 to vector<8x128xf32>
    %67 = arith.subf %66, %60 : vector<8x128xf32>
    %68 = arith.mulf %67, %65 : vector<8x128xf32>
    %69 = arith.mulf %60, %36 : vector<8x128xf32>
    %70 = arith.addf %68, %69 : vector<8x128xf32>
    %c1_21 = arith.constant 1 : index
    %c0_22 = arith.constant 0 : index
    %c0_23 = arith.constant 0 : index
    %71 = vector.load %arg4[%c1_21, %c0_22, %c0_23] : memref<8x8x128xf32, #tpu.memory_space<vmem>>, vector<1x8x128xf32>
    %72 = vector.shape_cast %71 : vector<1x8x128xf32> to vector<8x128xf32>
    %73 = vector.shape_cast %70 : vector<8x128xf32> to vector<1x8x128xf32>
    tpu.vector_store %arg4[%c1_21, %c0_22, %c0_23], %73 {strides = array<i32>} : memref<8x8x128xf32, #tpu.memory_space<vmem>>, vector<1x8x128xf32>,
    %c2 = arith.constant 2 : index
    %c0_24 = arith.constant 0 : index
    %c0_25 = arith.constant 0 : index
    %74 = vector.load %arg1[%c2, %c0_24, %c0_25] : memref<8x8x384xf32, #tpu.memory_space<vmem>>, vector<1x8x384xf32>
    %75 = vector.shape_cast %74 : vector<1x8x384xf32> to vector<8x384xf32>
    %cst_26 = arith.constant dense<0.000000e+00> : vector<8x384xf32>
    %76 = tpu.matmul %70, %3, %cst_26 {dimension_numbers = #tpu.dot_dimension_numbers<[1], [0], [0], [1], [0, 0, 1, 1], [], []>} : vector<8x128xf32>, vector<128x384xf32>, vector<8x384xf32> -> vector<8x384xf32>
    %77 = vector.broadcast %4 : vector<1x384xf32> to vector<8x384xf32>
    %78 = arith.addf %76, %77 : vector<8x384xf32>
    %79 = vector.extract_strided_slice %75 {offsets = [0, 0], sizes = [8, 128], strides = [1, 1]} : vector<8x384xf32> to vector<8x128xf32>
    %80 = vector.extract_strided_slice %78 {offsets = [0, 0], sizes = [8, 128], strides = [1, 1]} : vector<8x384xf32> to vector<8x128xf32>
    %81 = arith.addf %79, %80 : vector<8x128xf32>
    %82 = arith.negf %81 : vector<8x128xf32>
    %83 = math.exp %82 : vector<8x128xf32>
    %cst_27 = arith.constant 1.000000e+00 : f32
    %84 = vector.broadcast %cst_27 : f32 to vector<8x128xf32>
    %85 = arith.addf %84, %83 : vector<8x128xf32>
    %86 = arith.divf %84, %85 : vector<8x128xf32>
    %87 = vector.extract_strided_slice %75 {offsets = [0, 128], sizes = [8, 128], strides = [1, 1]} : vector<8x384xf32> to vector<8x128xf32>
    %88 = vector.extract_strided_slice %78 {offsets = [0, 128], sizes = [8, 128], strides = [1, 1]} : vector<8x384xf32> to vector<8x128xf32>
    %89 = arith.addf %87, %88 : vector<8x128xf32>
    %90 = arith.negf %89 : vector<8x128xf32>
    %91 = math.exp %90 : vector<8x128xf32>
    %cst_28 = arith.constant 1.000000e+00 : f32
    %92 = vector.broadcast %cst_28 : f32 to vector<8x128xf32>
    %93 = arith.addf %92, %91 : vector<8x128xf32>
    %94 = arith.divf %92, %93 : vector<8x128xf32>
    %95 = vector.extract_strided_slice %75 {offsets = [0, 256], sizes = [8, 128], strides = [1, 1]} : vector<8x384xf32> to vector<8x128xf32>
    %96 = vector.extract_strided_slice %78 {offsets = [0, 256], sizes = [8, 128], strides = [1, 1]} : vector<8x384xf32> to vector<8x128xf32>
    %97 = arith.mulf %86, %96 : vector<8x128xf32>
    %98 = arith.addf %95, %97 : vector<8x128xf32>
    %99 = math.tanh %98 : vector<8x128xf32>
    %cst_29 = arith.constant 1.000000e+00 : f32
    %100 = vector.broadcast %cst_29 : f32 to vector<8x128xf32>
    %101 = arith.subf %100, %94 : vector<8x128xf32>
    %102 = arith.mulf %101, %99 : vector<8x128xf32>
    %103 = arith.mulf %94, %70 : vector<8x128xf32>
    %104 = arith.addf %102, %103 : vector<8x128xf32>
    %c2_30 = arith.constant 2 : index
    %c0_31 = arith.constant 0 : index
    %c0_32 = arith.constant 0 : index
    %105 = vector.load %arg4[%c2_30, %c0_31, %c0_32] : memref<8x8x128xf32, #tpu.memory_space<vmem>>, vector<1x8x128xf32>
    %106 = vector.shape_cast %105 : vector<1x8x128xf32> to vector<8x128xf32>
    %107 = vector.shape_cast %104 : vector<8x128xf32> to vector<1x8x128xf32>
    tpu.vector_store %arg4[%c2_30, %c0_31, %c0_32], %107 {strides = array<i32>} : memref<8x8x128xf32, #tpu.memory_space<vmem>>, vector<1x8x128xf32>,
    %c3 = arith.constant 3 : index
    %c0_33 = arith.constant 0 : index
    %c0_34 = arith.constant 0 : index
    %108 = vector.load %arg1[%c3, %c0_33, %c0_34] : memref<8x8x384xf32, #tpu.memory_space<vmem>>, vector<1x8x384xf32>
    %109 = vector.shape_cast %108 : vector<1x8x384xf32> to vector<8x384xf32>
    %cst_35 = arith.constant dense<0.000000e+00> : vector<8x384xf32>
    %110 = tpu.matmul %104, %3, %cst_35 {dimension_numbers = #tpu.dot_dimension_numbers<[1], [0], [0], [1], [0, 0, 1, 1], [], []>} : vector<8x128xf32>, vector<128x384xf32>, vector<8x384xf32> -> vector<8x384xf32>
    %111 = vector.broadcast %4 : vector<1x384xf32> to vector<8x384xf32>
    %112 = arith.addf %110, %111 : vector<8x384xf32>
    %113 = vector.extract_strided_slice %109 {offsets = [0, 0], sizes = [8, 128], strides = [1, 1]} : vector<8x384xf32> to vector<8x128xf32>
    %114 = vector.extract_strided_slice %112 {offsets = [0, 0], sizes = [8, 128], strides = [1, 1]} : vector<8x384xf32> to vector<8x128xf32>
    %115 = arith.addf %113, %114 : vector<8x128xf32>
    %116 = arith.negf %115 : vector<8x128xf32>
    %117 = math.exp %116 : vector<8x128xf32>
    %cst_36 = arith.constant 1.000000e+00 : f32
    %118 = vector.broadcast %cst_36 : f32 to vector<8x128xf32>
    %119 = arith.addf %118, %117 : vector<8x128xf32>
    %120 = arith.divf %118, %119 : vector<8x128xf32>
    %121 = vector.extract_strided_slice %109 {offsets = [0, 128], sizes = [8, 128], strides = [1, 1]} : vector<8x384xf32> to vector<8x128xf32>
    %122 = vector.extract_strided_slice %112 {offsets = [0, 128], sizes = [8, 128], strides = [1, 1]} : vector<8x384xf32> to vector<8x128xf32>
    %123 = arith.addf %121, %122 : vector<8x128xf32>
    %124 = arith.negf %123 : vector<8x128xf32>
    %125 = math.exp %124 : vector<8x128xf32>
    %cst_37 = arith.constant 1.000000e+00 : f32
    %126 = vector.broadcast %cst_37 : f32 to vector<8x128xf32>
    %127 = arith.addf %126, %125 : vector<8x128xf32>
    %128 = arith.divf %126, %127 : vector<8x128xf32>
    %129 = vector.extract_strided_slice %109 {offsets = [0, 256], sizes = [8, 128], strides = [1, 1]} : vector<8x384xf32> to vector<8x128xf32>
    %130 = vector.extract_strided_slice %112 {offsets = [0, 256], sizes = [8, 128], strides = [1, 1]} : vector<8x384xf32> to vector<8x128xf32>
    %131 = arith.mulf %120, %130 : vector<8x128xf32>
    %132 = arith.addf %129, %131 : vector<8x128xf32>
    %133 = math.tanh %132 : vector<8x128xf32>
    %cst_38 = arith.constant 1.000000e+00 : f32
    %134 = vector.broadcast %cst_38 : f32 to vector<8x128xf32>
    %135 = arith.subf %134, %128 : vector<8x128xf32>
    %136 = arith.mulf %135, %133 : vector<8x128xf32>
    %137 = arith.mulf %128, %104 : vector<8x128xf32>
    %138 = arith.addf %136, %137 : vector<8x128xf32>
    %c3_39 = arith.constant 3 : index
    %c0_40 = arith.constant 0 : index
    %c0_41 = arith.constant 0 : index
    %139 = vector.load %arg4[%c3_39, %c0_40, %c0_41] : memref<8x8x128xf32, #tpu.memory_space<vmem>>, vector<1x8x128xf32>
    %140 = vector.shape_cast %139 : vector<1x8x128xf32> to vector<8x128xf32>
    %141 = vector.shape_cast %138 : vector<8x128xf32> to vector<1x8x128xf32>
    tpu.vector_store %arg4[%c3_39, %c0_40, %c0_41], %141 {strides = array<i32>} : memref<8x8x128xf32, #tpu.memory_space<vmem>>, vector<1x8x128xf32>,
    %c4 = arith.constant 4 : index
    %c0_42 = arith.constant 0 : index
    %c0_43 = arith.constant 0 : index
    %142 = vector.load %arg1[%c4, %c0_42, %c0_43] : memref<8x8x384xf32, #tpu.memory_space<vmem>>, vector<1x8x384xf32>
    %143 = vector.shape_cast %142 : vector<1x8x384xf32> to vector<8x384xf32>
    %cst_44 = arith.constant dense<0.000000e+00> : vector<8x384xf32>
    %144 = tpu.matmul %138, %3, %cst_44 {dimension_numbers = #tpu.dot_dimension_numbers<[1], [0], [0], [1], [0, 0, 1, 1], [], []>} : vector<8x128xf32>, vector<128x384xf32>, vector<8x384xf32> -> vector<8x384xf32>
    %145 = vector.broadcast %4 : vector<1x384xf32> to vector<8x384xf32>
    %146 = arith.addf %144, %145 : vector<8x384xf32>
    %147 = vector.extract_strided_slice %143 {offsets = [0, 0], sizes = [8, 128], strides = [1, 1]} : vector<8x384xf32> to vector<8x128xf32>
    %148 = vector.extract_strided_slice %146 {offsets = [0, 0], sizes = [8, 128], strides = [1, 1]} : vector<8x384xf32> to vector<8x128xf32>
    %149 = arith.addf %147, %148 : vector<8x128xf32>
    %150 = arith.negf %149 : vector<8x128xf32>
    %151 = math.exp %150 : vector<8x128xf32>
    %cst_45 = arith.constant 1.000000e+00 : f32
    %152 = vector.broadcast %cst_45 : f32 to vector<8x128xf32>
    %153 = arith.addf %152, %151 : vector<8x128xf32>
    %154 = arith.divf %152, %153 : vector<8x128xf32>
    %155 = vector.extract_strided_slice %143 {offsets = [0, 128], sizes = [8, 128], strides = [1, 1]} : vector<8x384xf32> to vector<8x128xf32>
    %156 = vector.extract_strided_slice %146 {offsets = [0, 128], sizes = [8, 128], strides = [1, 1]} : vector<8x384xf32> to vector<8x128xf32>
    %157 = arith.addf %155, %156 : vector<8x128xf32>
    %158 = arith.negf %157 : vector<8x128xf32>
    %159 = math.exp %158 : vector<8x128xf32>
    %cst_46 = arith.constant 1.000000e+00 : f32
    %160 = vector.broadcast %cst_46 : f32 to vector<8x128xf32>
    %161 = arith.addf %160, %159 : vector<8x128xf32>
    %162 = arith.divf %160, %161 : vector<8x128xf32>
    %163 = vector.extract_strided_slice %143 {offsets = [0, 256], sizes = [8, 128], strides = [1, 1]} : vector<8x384xf32> to vector<8x128xf32>
    %164 = vector.extract_strided_slice %146 {offsets = [0, 256], sizes = [8, 128], strides = [1, 1]} : vector<8x384xf32> to vector<8x128xf32>
    %165 = arith.mulf %154, %164 : vector<8x128xf32>
    %166 = arith.addf %163, %165 : vector<8x128xf32>
    %167 = math.tanh %166 : vector<8x128xf32>
    %cst_47 = arith.constant 1.000000e+00 : f32
    %168 = vector.broadcast %cst_47 : f32 to vector<8x128xf32>
    %169 = arith.subf %168, %162 : vector<8x128xf32>
    %170 = arith.mulf %169, %167 : vector<8x128xf32>
    %171 = arith.mulf %162, %138 : vector<8x128xf32>
    %172 = arith.addf %170, %171 : vector<8x128xf32>
    %c4_48 = arith.constant 4 : index
    %c0_49 = arith.constant 0 : index
    %c0_50 = arith.constant 0 : index
    %173 = vector.load %arg4[%c4_48, %c0_49, %c0_50] : memref<8x8x128xf32, #tpu.memory_space<vmem>>, vector<1x8x128xf32>
    %174 = vector.shape_cast %173 : vector<1x8x128xf32> to vector<8x128xf32>
    %175 = vector.shape_cast %172 : vector<8x128xf32> to vector<1x8x128xf32>
    tpu.vector_store %arg4[%c4_48, %c0_49, %c0_50], %175 {strides = array<i32>} : memref<8x8x128xf32, #tpu.memory_space<vmem>>, vector<1x8x128xf32>,
    %c5 = arith.constant 5 : index
    %c0_51 = arith.constant 0 : index
    %c0_52 = arith.constant 0 : index
    %176 = vector.load %arg1[%c5, %c0_51, %c0_52] : memref<8x8x384xf32, #tpu.memory_space<vmem>>, vector<1x8x384xf32>
    %177 = vector.shape_cast %176 : vector<1x8x384xf32> to vector<8x384xf32>
    %cst_53 = arith.constant dense<0.000000e+00> : vector<8x384xf32>
    %178 = tpu.matmul %172, %3, %cst_53 {dimension_numbers = #tpu.dot_dimension_numbers<[1], [0], [0], [1], [0, 0, 1, 1], [], []>} : vector<8x128xf32>, vector<128x384xf32>, vector<8x384xf32> -> vector<8x384xf32>
    %179 = vector.broadcast %4 : vector<1x384xf32> to vector<8x384xf32>
    %180 = arith.addf %178, %179 : vector<8x384xf32>
    %181 = vector.extract_strided_slice %177 {offsets = [0, 0], sizes = [8, 128], strides = [1, 1]} : vector<8x384xf32> to vector<8x128xf32>
    %182 = vector.extract_strided_slice %180 {offsets = [0, 0], sizes = [8, 128], strides = [1, 1]} : vector<8x384xf32> to vector<8x128xf32>
    %183 = arith.addf %181, %182 : vector<8x128xf32>
    %184 = arith.negf %183 : vector<8x128xf32>
    %185 = math.exp %184 : vector<8x128xf32>
    %cst_54 = arith.constant 1.000000e+00 : f32
    %186 = vector.broadcast %cst_54 : f32 to vector<8x128xf32>
    %187 = arith.addf %186, %185 : vector<8x128xf32>
    %188 = arith.divf %186, %187 : vector<8x128xf32>
    %189 = vector.extract_strided_slice %177 {offsets = [0, 128], sizes = [8, 128], strides = [1, 1]} : vector<8x384xf32> to vector<8x128xf32>
    %190 = vector.extract_strided_slice %180 {offsets = [0, 128], sizes = [8, 128], strides = [1, 1]} : vector<8x384xf32> to vector<8x128xf32>
    %191 = arith.addf %189, %190 : vector<8x128xf32>
    %192 = arith.negf %191 : vector<8x128xf32>
    %193 = math.exp %192 : vector<8x128xf32>
    %cst_55 = arith.constant 1.000000e+00 : f32
    %194 = vector.broadcast %cst_55 : f32 to vector<8x128xf32>
    %195 = arith.addf %194, %193 : vector<8x128xf32>
    %196 = arith.divf %194, %195 : vector<8x128xf32>
    %197 = vector.extract_strided_slice %177 {offsets = [0, 256], sizes = [8, 128], strides = [1, 1]} : vector<8x384xf32> to vector<8x128xf32>
    %198 = vector.extract_strided_slice %180 {offsets = [0, 256], sizes = [8, 128], strides = [1, 1]} : vector<8x384xf32> to vector<8x128xf32>
    %199 = arith.mulf %188, %198 : vector<8x128xf32>
    %200 = arith.addf %197, %199 : vector<8x128xf32>
    %201 = math.tanh %200 : vector<8x128xf32>
    %cst_56 = arith.constant 1.000000e+00 : f32
    %202 = vector.broadcast %cst_56 : f32 to vector<8x128xf32>
    %203 = arith.subf %202, %196 : vector<8x128xf32>
    %204 = arith.mulf %203, %201 : vector<8x128xf32>
    %205 = arith.mulf %196, %172 : vector<8x128xf32>
    %206 = arith.addf %204, %205 : vector<8x128xf32>
    %c5_57 = arith.constant 5 : index
    %c0_58 = arith.constant 0 : index
    %c0_59 = arith.constant 0 : index
    %207 = vector.load %arg4[%c5_57, %c0_58, %c0_59] : memref<8x8x128xf32, #tpu.memory_space<vmem>>, vector<1x8x128xf32>
    %208 = vector.shape_cast %207 : vector<1x8x128xf32> to vector<8x128xf32>
    %209 = vector.shape_cast %206 : vector<8x128xf32> to vector<1x8x128xf32>
    tpu.vector_store %arg4[%c5_57, %c0_58, %c0_59], %209 {strides = array<i32>} : memref<8x8x128xf32, #tpu.memory_space<vmem>>, vector<1x8x128xf32>,
    %c6 = arith.constant 6 : index
    %c0_60 = arith.constant 0 : index
    %c0_61 = arith.constant 0 : index
    %210 = vector.load %arg1[%c6, %c0_60, %c0_61] : memref<8x8x384xf32, #tpu.memory_space<vmem>>, vector<1x8x384xf32>
    %211 = vector.shape_cast %210 : vector<1x8x384xf32> to vector<8x384xf32>
    %cst_62 = arith.constant dense<0.000000e+00> : vector<8x384xf32>
    %212 = tpu.matmul %206, %3, %cst_62 {dimension_numbers = #tpu.dot_dimension_numbers<[1], [0], [0], [1], [0, 0, 1, 1], [], []>} : vector<8x128xf32>, vector<128x384xf32>, vector<8x384xf32> -> vector<8x384xf32>
    %213 = vector.broadcast %4 : vector<1x384xf32> to vector<8x384xf32>
    %214 = arith.addf %212, %213 : vector<8x384xf32>
    %215 = vector.extract_strided_slice %211 {offsets = [0, 0], sizes = [8, 128], strides = [1, 1]} : vector<8x384xf32> to vector<8x128xf32>
    %216 = vector.extract_strided_slice %214 {offsets = [0, 0], sizes = [8, 128], strides = [1, 1]} : vector<8x384xf32> to vector<8x128xf32>
    %217 = arith.addf %215, %216 : vector<8x128xf32>
    %218 = arith.negf %217 : vector<8x128xf32>
    %219 = math.exp %218 : vector<8x128xf32>
    %cst_63 = arith.constant 1.000000e+00 : f32
    %220 = vector.broadcast %cst_63 : f32 to vector<8x128xf32>
    %221 = arith.addf %220, %219 : vector<8x128xf32>
    %222 = arith.divf %220, %221 : vector<8x128xf32>
    %223 = vector.extract_strided_slice %211 {offsets = [0, 128], sizes = [8, 128], strides = [1, 1]} : vector<8x384xf32> to vector<8x128xf32>
    %224 = vector.extract_strided_slice %214 {offsets = [0, 128], sizes = [8, 128], strides = [1, 1]} : vector<8x384xf32> to vector<8x128xf32>
    %225 = arith.addf %223, %224 : vector<8x128xf32>
    %226 = arith.negf %225 : vector<8x128xf32>
    %227 = math.exp %226 : vector<8x128xf32>
    %cst_64 = arith.constant 1.000000e+00 : f32
    %228 = vector.broadcast %cst_64 : f32 to vector<8x128xf32>
    %229 = arith.addf %228, %227 : vector<8x128xf32>
    %230 = arith.divf %228, %229 : vector<8x128xf32>
    %231 = vector.extract_strided_slice %211 {offsets = [0, 256], sizes = [8, 128], strides = [1, 1]} : vector<8x384xf32> to vector<8x128xf32>
    %232 = vector.extract_strided_slice %214 {offsets = [0, 256], sizes = [8, 128], strides = [1, 1]} : vector<8x384xf32> to vector<8x128xf32>
    %233 = arith.mulf %222, %232 : vector<8x128xf32>
    %234 = arith.addf %231, %233 : vector<8x128xf32>
    %235 = math.tanh %234 : vector<8x128xf32>
    %cst_65 = arith.constant 1.000000e+00 : f32
    %236 = vector.broadcast %cst_65 : f32 to vector<8x128xf32>
    %237 = arith.subf %236, %230 : vector<8x128xf32>
    %238 = arith.mulf %237, %235 : vector<8x128xf32>
    %239 = arith.mulf %230, %206 : vector<8x128xf32>
    %240 = arith.addf %238, %239 : vector<8x128xf32>
    %c6_66 = arith.constant 6 : index
    %c0_67 = arith.constant 0 : index
    %c0_68 = arith.constant 0 : index
    %241 = vector.load %arg4[%c6_66, %c0_67, %c0_68] : memref<8x8x128xf32, #tpu.memory_space<vmem>>, vector<1x8x128xf32>
    %242 = vector.shape_cast %241 : vector<1x8x128xf32> to vector<8x128xf32>
    %243 = vector.shape_cast %240 : vector<8x128xf32> to vector<1x8x128xf32>
    tpu.vector_store %arg4[%c6_66, %c0_67, %c0_68], %243 {strides = array<i32>} : memref<8x8x128xf32, #tpu.memory_space<vmem>>, vector<1x8x128xf32>,
    %c7 = arith.constant 7 : index
    %c0_69 = arith.constant 0 : index
    %c0_70 = arith.constant 0 : index
    %244 = vector.load %arg1[%c7, %c0_69, %c0_70] : memref<8x8x384xf32, #tpu.memory_space<vmem>>, vector<1x8x384xf32>
    %245 = vector.shape_cast %244 : vector<1x8x384xf32> to vector<8x384xf32>
    %cst_71 = arith.constant dense<0.000000e+00> : vector<8x384xf32>
    %246 = tpu.matmul %240, %3, %cst_71 {dimension_numbers = #tpu.dot_dimension_numbers<[1], [0], [0], [1], [0, 0, 1, 1], [], []>} : vector<8x128xf32>, vector<128x384xf32>, vector<8x384xf32> -> vector<8x384xf32>
    %247 = vector.broadcast %4 : vector<1x384xf32> to vector<8x384xf32>
    %248 = arith.addf %246, %247 : vector<8x384xf32>
    %249 = vector.extract_strided_slice %245 {offsets = [0, 0], sizes = [8, 128], strides = [1, 1]} : vector<8x384xf32> to vector<8x128xf32>
    %250 = vector.extract_strided_slice %248 {offsets = [0, 0], sizes = [8, 128], strides = [1, 1]} : vector<8x384xf32> to vector<8x128xf32>
    %251 = arith.addf %249, %250 : vector<8x128xf32>
    %252 = arith.negf %251 : vector<8x128xf32>
    %253 = math.exp %252 : vector<8x128xf32>
    %cst_72 = arith.constant 1.000000e+00 : f32
    %254 = vector.broadcast %cst_72 : f32 to vector<8x128xf32>
    %255 = arith.addf %254, %253 : vector<8x128xf32>
    %256 = arith.divf %254, %255 : vector<8x128xf32>
    %257 = vector.extract_strided_slice %245 {offsets = [0, 128], sizes = [8, 128], strides = [1, 1]} : vector<8x384xf32> to vector<8x128xf32>
    %258 = vector.extract_strided_slice %248 {offsets = [0, 128], sizes = [8, 128], strides = [1, 1]} : vector<8x384xf32> to vector<8x128xf32>
    %259 = arith.addf %257, %258 : vector<8x128xf32>
    %260 = arith.negf %259 : vector<8x128xf32>
    %261 = math.exp %260 : vector<8x128xf32>
    %cst_73 = arith.constant 1.000000e+00 : f32
    %262 = vector.broadcast %cst_73 : f32 to vector<8x128xf32>
    %263 = arith.addf %262, %261 : vector<8x128xf32>
    %264 = arith.divf %262, %263 : vector<8x128xf32>
    %265 = vector.extract_strided_slice %245 {offsets = [0, 256], sizes = [8, 128], strides = [1, 1]} : vector<8x384xf32> to vector<8x128xf32>
    %266 = vector.extract_strided_slice %248 {offsets = [0, 256], sizes = [8, 128], strides = [1, 1]} : vector<8x384xf32> to vector<8x128xf32>
    %267 = arith.mulf %256, %266 : vector<8x128xf32>
    %268 = arith.addf %265, %267 : vector<8x128xf32>
    %269 = math.tanh %268 : vector<8x128xf32>
    %cst_74 = arith.constant 1.000000e+00 : f32
    %270 = vector.broadcast %cst_74 : f32 to vector<8x128xf32>
    %271 = arith.subf %270, %264 : vector<8x128xf32>
    %272 = arith.mulf %271, %269 : vector<8x128xf32>
    %273 = arith.mulf %264, %240 : vector<8x128xf32>
    %274 = arith.addf %272, %273 : vector<8x128xf32>
    %c7_75 = arith.constant 7 : index
    %c0_76 = arith.constant 0 : index
    %c0_77 = arith.constant 0 : index
    %275 = vector.load %arg4[%c7_75, %c0_76, %c0_77] : memref<8x8x128xf32, #tpu.memory_space<vmem>>, vector<1x8x128xf32>
    %276 = vector.shape_cast %275 : vector<1x8x128xf32> to vector<8x128xf32>
    %277 = vector.shape_cast %274 : vector<8x128xf32> to vector<1x8x128xf32>
    tpu.vector_store %arg4[%c7_75, %c0_76, %c0_77], %277 {strides = array<i32>} : memref<8x8x128xf32, #tpu.memory_space<vmem>>, vector<1x8x128xf32>,
    %c0_78 = arith.constant 0 : index
    %c0_79 = arith.constant 0 : index
    %278 = vector.load %arg5[%c0_78, %c0_79] : memref<8x128xf32, #tpu.memory_space<vmem>>, vector<8x128xf32>
    tpu.vector_store %arg5[%c0_78, %c0_79], %274 {strides = array<i32>} : memref<8x128xf32, #tpu.memory_space<vmem>>, vector<8x128xf32>,
    return
  }
  func.func @transform_0(%arg0: i32) -> (i32, i32, i32) {
    %c0_i32 = arith.constant 0 : i32
    %c0_i32_0 = arith.constant 0 : i32
    %c0_i32_1 = arith.constant 0 : i32
    return %arg0, %c0_i32, %c0_i32_0 : i32, i32, i32
  }
  func.func @transform_1(%arg0: i32) -> (i32, i32) {
    %c0_i32 = arith.constant 0 : i32
    %c0_i32_0 = arith.constant 0 : i32
    %c0_i32_1 = arith.constant 0 : i32
    return %c0_i32, %c0_i32_0 : i32, i32
  }
  func.func @transform_2(%arg0: i32) -> (i32, i32) {
    %c0_i32 = arith.constant 0 : i32
    %c0_i32_0 = arith.constant 0 : i32
    %c0_i32_1 = arith.constant 0 : i32
    return %c0_i32, %c0_i32_0 : i32, i32
  }
  func.func @transform_3(%arg0: i32) -> (i32, i32, i32) {
    %c0_i32 = arith.constant 0 : i32
    %c0_i32_0 = arith.constant 0 : i32
    %c0_i32_1 = arith.constant 0 : i32
    return %arg0, %c0_i32, %c0_i32_0 : i32, i32, i32
  }
}

</mosaic_0001>

<llo_original>
// kernel: cudnn_gru_forward.1
$region0: #{cudnn_gru_forward.1}
  #allocation0 [shape = 'u32[]', space=smem, size = 0x4, offset = 0x4, fixed_abs, tag = 'smem constant byte address 0x4 - core index']
  #allocation1 [shape = 'u32[144,128]{1,0:T(1,128)}', space=vmem, size = 0x12000, scoped, tag = 'internal scratch']
  #allocation2 [shape = 'f32[8,128]{1,0:T(8,128)}', space=vmem, size = 0x1000, scoped, tag = 'scratch operand']
  %s0 = inlined_call_operand.vmem [shape: f32[8,8,384], index: 0, kind: input, shape index: {}]
  %s1 = inlined_call_operand.vmem [shape: f32[128,384], index: 1, kind: input, shape index: {}]
  %s2 = inlined_call_operand.vmem [shape: f32[1,384], index: 2, kind: input, shape index: {}]
  %s3 = inlined_call_operand.vmem [shape: f32[8,8,128], index: 3, kind: output, shape index: {}]
  %s4 = sld [smem:[#allocation0]]
  $region26: #{cudnn_gru_forward.1} parent=0
    _
  %s6 = ssub.s32 1, %s4
  %s7 = scalar_select 0, %s6, %s4
  // Predicated region
  $region2: #{cudnn_gru_forward.1} parent=0 // pred_check
    _
  $region3: #{cudnn_gru_forward.1} parent=0 // pred_check_branch
    %9 = sbr.rel (0) target = $region5
  $region4: #{cudnn_gru_forward.1} parent=0 // pred_region
    _
  $region5: #{cudnn_gru_forward.1} parent=0 // pred_fallthru
    _
  // Predicated region
  $region6: #{cudnn_gru_forward.1} parent=0 // pred_check
    _
  $region7: #{cudnn_gru_forward.1} parent=0 // pred_check_branch
    %11 = sbr.rel (0) target = $region9
  $region8: #{cudnn_gru_forward.1} parent=0 // pred_region
    _
  $region9: #{cudnn_gru_forward.1} parent=0 // pred_fallthru
    _
  // Predicated region
  $region10: #{cudnn_gru_forward.1} parent=0 // pred_check
    _
  $region11: #{cudnn_gru_forward.1} parent=0 // pred_check_branch
    %13 = sbr.rel (0) target = $region13
  $region12: #{cudnn_gru_forward.1} parent=0 // pred_region
    _
  $region13: #{cudnn_gru_forward.1} parent=0 // pred_fallthru
    _
  %p14 = scmp.eq.s32.totalorder 0, 0
  // Predicated region
  $region14: #{cudnn_gru_forward.1} parent=0 // pred_check
    %p15 = pneg %p14
  $region15: #{cudnn_gru_forward.1} parent=0 // pred_check_branch
    %17 = sbr.rel (%p15) target = $region17
  $region16: #{cudnn_gru_forward.1} parent=0 // pred_region
    %18 = vst [vmem:[#allocation2] sm:$0xff] 0.0
  $region17: #{cudnn_gru_forward.1} parent=0 // pred_fallthru
    _
  %v19 = vld [vmem:[%s1] sm:$0xff]
  %v20 = vld [vmem:[%s1 + $0x8] sm:$0xff]
  %v21 = vld [vmem:[%s1 + $0x10] sm:$0xff]
  %v22 = vld [vmem:[%s1 + $0x18] sm:$0xff]
  %v23 = vld [vmem:[%s1 + $0x20] sm:$0xff]
  %v24 = vld [vmem:[%s1 + $0x28] sm:$0xff]
  %v25 = vld [vmem:[%s1 + $0x30] sm:$0xff]
  %v26 = vld [vmem:[%s1 + $0x38] sm:$0xff]
  %v27 = vld [vmem:[%s1 + $0x40] sm:$0xff]
  %v28 = vld [vmem:[%s1 + $0x48] sm:$0xff]
  %v29 = vld [vmem:[%s1 + $0x50] sm:$0xff]
  %v30 = vld [vmem:[%s1 + $0x58] sm:$0xff]
  %v31 = vld [vmem:[%s1 + $0x60] sm:$0xff]
  %v32 = vld [vmem:[%s1 + $0x68] sm:$0xff]
  %v33 = vld [vmem:[%s1 + $0x70] sm:$0xff]
  %v34 = vld [vmem:[%s1 + $0x78] sm:$0xff]
  %v35 = vld [vmem:[%s1 + $0x80] sm:$0xff]
  %v36 = vld [vmem:[%s1 + $0x88] sm:$0xff]
  %v37 = vld [vmem:[%s1 + $0x90] sm:$0xff]
  %v38 = vld [vmem:[%s1 + $0x98] sm:$0xff]
  %v39 = vld [vmem:[%s1 + $0xa0] sm:$0xff]
  %v40 = vld [vmem:[%s1 + $0xa8] sm:$0xff]
  %v41 = vld [vmem:[%s1 + $0xb0] sm:$0xff]
  %v42 = vld [vmem:[%s1 + $0xb8] sm:$0xff]
  %v43 = vld [vmem:[%s1 + $0xc0] sm:$0xff]
  %v44 = vld [vmem:[%s1 + $0xc8] sm:$0xff]
  %v45 = vld [vmem:[%s1 + $0xd0] sm:$0xff]
  %v46 = vld [vmem:[%s1 + $0xd8] sm:$0xff]
  %v47 = vld [vmem:[%s1 + $0xe0] sm:$0xff]
  %v48 = vld [vmem:[%s1 + $0xe8] sm:$0xff]
  %v49 = vld [vmem:[%s1 + $0xf0] sm:$0xff]
  %v50 = vld [vmem:[%s1 + $0xf8] sm:$0xff]
  %v51 = vld [vmem:[%s1 + $0x100] sm:$0xff]
  %v52 = vld [vmem:[%s1 + $0x108] sm:$0xff]
  %v53 = vld [vmem:[%s1 + $0x110] sm:$0xff]
  %v54 = vld [vmem:[%s1 + $0x118] sm:$0xff]
  %v55 = vld [vmem:[%s1 + $0x120] sm:$0xff]
  %v56 = vld [vmem:[%s1 + $0x128] sm:$0xff]
  %v57 = vld [vmem:[%s1 + $0x130] sm:$0xff]
  %v58 = vld [vmem:[%s1 + $0x138] sm:$0xff]
  %v59 = vld [vmem:[%s1 + $0x140] sm:$0xff]
  %v60 = vld [vmem:[%s1 + $0x148] sm:$0xff]
  %v61 = vld [vmem:[%s1 + $0x150] sm:$0xff]
  %v62 = vld [vmem:[%s1 + $0x158] sm:$0xff]
  %v63 = vld [vmem:[%s1 + $0x160] sm:$0xff]
  %v64 = vld [vmem:[%s1 + $0x168] sm:$0xff]
  %v65 = vld [vmem:[%s1 + $0x170] sm:$0xff]
  %v66 = vld [vmem:[%s1 + $0x178] sm:$0xff]
  %v67 = vld [vmem:[%s2] sm:$0x7]
  %v68 = vld [vmem:[#allocation2] sm:$0xff]
  %v69 = vld [vmem:[%s0] sm:$0xff]
  %v70 = vld [vmem:[%s0 + $0x8] sm:$0xff]
  %v71 = vld [vmem:[%s0 + $0x10] sm:$0xff]
  %v73 = vlaneseq
  %v74 = vshrl.u32 %v73, 7
  %v75 = vsub.s32 0, %v74
  %v76 = vrot.slane %v67, %v75
  %v77 = vlaneseq
  %v78 = vshrl.u32 %v77, 7
  %v79 = vsub.s32 1, %v78
  %v80 = vrot.slane %v67, %v79
  %v81 = vlaneseq
  %v82 = vshrl.u32 %v81, 7
  %v83 = vsub.s32 2, %v82
  %v84 = vrot.slane %v67, %v83
  %88 = vmatprep.subr.mxu0 %v20
  %89 = vmatpush1.msra.mxu0 %v19
  %90 = vmatprep.subr.mxu0 %v23
  %91 = vmatpush1.msra.mxu0 %v22
  %92 = vmatprep.subr.mxu0 %v26
  %93 = vmatpush1.msra.mxu0 %v25
  %94 = vmatprep.subr.mxu0 %v29
  %95 = vmatpush1.msra.mxu0 %v28
  %96 = vmatprep.subr.mxu0 %v32
  %97 = vmatpush1.msra.mxu0 %v31
  %98 = vmatprep.subr.mxu0 %v35
  %99 = vmatpush1.msra.mxu0 %v34
  %100 = vmatprep.subr.mxu0 %v38
  %101 = vmatpush1.msra.mxu0 %v37
  %102 = vmatprep.subr.mxu0 %v41
  %103 = vmatpush1.msra.mxu0 %v40
  %104 = vmatprep.subr.mxu0 %v44
  %105 = vmatpush1.msra.mxu0 %v43
  %106 = vmatprep.subr.mxu0 %v47
  %107 = vmatpush1.msra.mxu0 %v46
  %108 = vmatprep.subr.mxu0 %v50
  %109 = vmatpush1.msra.mxu0 %v49
  %110 = vmatprep.subr.mxu0 %v53
  %111 = vmatpush1.msra.mxu0 %v52
  %112 = vmatprep.subr.mxu0 %v56
  %113 = vmatpush1.msra.mxu0 %v55
  %114 = vmatprep.subr.mxu0 %v59
  %115 = vmatpush1.msra.mxu0 %v58
  %116 = vmatprep.subr.mxu0 %v62
  %117 = vmatpush1.msra.mxu0 %v61
  %118 = vmatprep.subr.mxu0 %v65
  %119 = vmatpush1.msra.mxu0 %v64
  %120 = vmatprep.subr.mxu0 0.0
  %121 = vmatpush1.msra.mxu0 0.0
  %122 = vmatprep.subr.mxu0 0.0
  %123 = vmatpush1.msra.mxu0 0.0
  %124 = vmatprep.subr.mxu0 0.0
  %125 = vmatpush1.msra.mxu0 0.0
  %126 = vmatprep.subr.mxu0 0.0
  %127 = vmatpush1.msra.mxu0 0.0
  %128 = vmatprep.subr.mxu0 0.0
  %129 = vmatpush1.msra.mxu0 0.0
  %130 = vmatprep.subr.mxu0 0.0
  %131 = vmatpush1.msra.mxu0 0.0
  %132 = vmatprep.subr.mxu0 0.0
  %133 = vmatpush1.msra.mxu0 0.0
  %134 = vmatprep.subr.mxu0 0.0
  %135 = vmatpush1.msra.mxu0 0.0
  %136 = vmatprep.subr.mxu0 0.0
  %137 = vmatpush1.msra.mxu0 0.0
  %138 = vmatprep.subr.mxu0 0.0
  %139 = vmatpush1.msra.mxu0 0.0
  %140 = vmatprep.subr.mxu0 0.0
  %141 = vmatpush1.msra.mxu0 0.0
  %142 = vmatprep.subr.mxu0 0.0
  %143 = vmatpush1.msra.mxu0 0.0
  %144 = vmatprep.subr.mxu0 0.0
  %145 = vmatpush1.msra.mxu0 0.0
  %146 = vmatprep.subr.mxu0 0.0
  %147 = vmatpush1.msra.mxu0 0.0
  %148 = vmatprep.subr.mxu0 0.0
  %149 = vmatpush1.msra.mxu0 0.0
  %150 = vmatprep.subr.mxu0 0.0
  %151 = vmatpush1.msra.mxu0 0.0
  %152 = vmatprep.mubr.f32.mxu0 0.0
  %153 = vmatmul.mubr.f32.gmra.mrb[0].mxu0 %v68
  %v154 = vpop.f32.mrb[0].mxu0
  %v155 = vadd.f32 %v76, %v154
  %v156 = vpop.f32.mrb[0].mxu0
  %v157 = vadd.f32 %v80, %v156
  %158 = vdwg.mxu0
  %159 = vmatprep.subr.mxu0 0.0
  %160 = vmatpush1.msra.mxu0 %v21
  %161 = vmatprep.subr.mxu0 0.0
  %162 = vmatpush1.msra.mxu0 %v24
  %163 = vmatprep.subr.mxu0 0.0
  %164 = vmatpush1.msra.mxu0 %v27
  %165 = vmatprep.subr.mxu0 0.0
  %166 = vmatpush1.msra.mxu0 %v30
  %167 = vmatprep.subr.mxu0 0.0
  %168 = vmatpush1.msra.mxu0 %v33
  %169 = vmatprep.subr.mxu0 0.0
  %170 = vmatpush1.msra.mxu0 %v36
  %171 = vmatprep.subr.mxu0 0.0
  %172 = vmatpush1.msra.mxu0 %v39
  %173 = vmatprep.subr.mxu0 0.0
  %174 = vmatpush1.msra.mxu0 %v42
  %175 = vmatprep.subr.mxu0 0.0
  %176 = vmatpush1.msra.mxu0 %v45
  %177 = vmatprep.subr.mxu0 0.0
  %178 = vmatpush1.msra.mxu0 %v48
  %179 = vmatprep.subr.mxu0 0.0
  %180 = vmatpush1.msra.mxu0 %v51
  %181 = vmatprep.subr.mxu0 0.0
  %182 = vmatpush1.msra.mxu0 %v54
  %183 = vmatprep.subr.mxu0 0.0
  %184 = vmatpush1.msra.mxu0 %v57
  %185 = vmatprep.subr.mxu0 0.0
  %186 = vmatpush1.msra.mxu0 %v60
  %187 = vmatprep.subr.mxu0 0.0
  %188 = vmatpush1.msra.mxu0 %v63
  %189 = vmatprep.subr.mxu0 0.0
  %190 = vmatpush1.msra.mxu0 %v66
  %191 = vmatprep.subr.mxu0 0.0
  %192 = vmatpush1.msra.mxu0 0.0
  %193 = vmatprep.subr.mxu0 0.0
  %194 = vmatpush1.msra.mxu0 0.0
  %195 = vmatprep.subr.mxu0 0.0
  %196 = vmatpush1.msra.mxu0 0.0
  %197 = vmatprep.subr.mxu0 0.0
  %198 = vmatpush1.msra.mxu0 0.0
  %199 = vmatprep.subr.mxu0 0.0
  %200 = vmatpush1.msra.mxu0 0.0
  %201 = vmatprep.subr.mxu0 0.0
  %202 = vmatpush1.msra.mxu0 0.0
  %203 = vmatprep.subr.mxu0 0.0
  %204 = vmatpush1.msra.mxu0 0.0
  %205 = vmatprep.subr.mxu0 0.0
  %206 = vmatpush1.msra.mxu0 0.0
  %207 = vmatprep.subr.mxu0 0.0
  %208 = vmatpush1.msra.mxu0 0.0
  %209 = vmatprep.subr.mxu0 0.0
  %210 = vmatpush1.msra.mxu0 0.0
  %211 = vmatprep.subr.mxu0 0.0
  %212 = vmatpush1.msra.mxu0 0.0
  %213 = vmatprep.subr.mxu0 0.0
  %214 = vmatpush1.msra.mxu0 0.0
  %215 = vmatprep.subr.mxu0 0.0
  %216 = vmatpush1.msra.mxu0 0.0
  %217 = vmatprep.subr.mxu0 0.0
  %218 = vmatpush1.msra.mxu0 0.0
  %219 = vmatprep.subr.mxu0 0.0
  %220 = vmatpush1.msra.mxu0 0.0
  %221 = vmatprep.subr.mxu0 0.0
  %222 = vmatpush1.msra.mxu0 0.0
  %223 = vmatprep.mubr.f32.mxu0 0.0
  %224 = vmatmul.mubr.f32.gmra.mrb[0].mxu0 %v68
  %v225 = vpop.f32.mrb[0].mxu0
  %v226 = vadd.f32 %v84, %v225
  %v227 = vpop.f32.mrb[0].mxu0
  %228 = vdwg.mxu0
  %v229 = vadd.f32 %v69, %v155
  %v230 = vxor.u32 %v229, 2147483648
  %v231 = vmul.f32 %v230, 1.442695
  %v232 = vpow.pop %v231
  %v233 = vadd.f32 %v232, 1.0
  %v234 = vrcp.pop %v233
  %v235 = vmul.f32 1.0, %v234
  %v236 = vadd.f32 %v70, %v157
  %v237 = vxor.u32 %v236, 2147483648
  %v238 = vmul.f32 %v237, 1.442695
  %v239 = vpow.pop %v238
  %v240 = vadd.f32 %v239, 1.0
  %v241 = vrcp.pop %v240
  %v242 = vmul.f32 1.0, %v241
  %v243 = vmul.f32 %v235, %v226
  %v244 = vadd.f32 %v71, %v243
  %v245 = vtanh.pop %v244
  %v246 = vsub.f32 1.0, %v242
  %v247 = vmul.f32 %v246, %v245
  %v248 = vmul.f32 %v242, %v68
  %v249 = vadd.f32 %v247, %v248
  %250 = vst [vmem:[%s3] sm:$0xff] %v249
  %s251 = scalar_lea.vmem %s0, 24
  %v252 = vld [vmem:[%s251] sm:$0xff]
  %v253 = vld [vmem:[%s251 + $0x8] sm:$0xff]
  %v254 = vld [vmem:[%s251 + $0x10] sm:$0xff]
  %255 = vmatprep.subr.mxu0 %v20
  %256 = vmatpush1.msra.mxu0 %v19
  %257 = vmatprep.subr.mxu0 %v23
  %258 = vmatpush1.msra.mxu0 %v22
  %259 = vmatprep.subr.mxu0 %v26
  %260 = vmatpush1.msra.mxu0 %v25
  %261 = vmatprep.subr.mxu0 %v29
  %262 = vmatpush1.msra.mxu0 %v28
  %263 = vmatprep.subr.mxu0 %v32
  %264 = vmatpush1.msra.mxu0 %v31
  %265 = vmatprep.subr.mxu0 %v35
  %266 = vmatpush1.msra.mxu0 %v34
  %267 = vmatprep.subr.mxu0 %v38
  %268 = vmatpush1.msra.mxu0 %v37
  %269 = vmatprep.subr.mxu0 %v41
  %270 = vmatpush1.msra.mxu0 %v40
  %271 = vmatprep.subr.mxu0 %v44
  %272 = vmatpush1.msra.mxu0 %v43
  %273 = vmatprep.subr.mxu0 %v47
  %274 = vmatpush1.msra.mxu0 %v46
  %275 = vmatprep.subr.mxu0 %v50
  %276 = vmatpush1.msra.mxu0 %v49
  %277 = vmatprep.subr.mxu0 %v53
  %278 = vmatpush1.msra.mxu0 %v52
  %279 = vmatprep.subr.mxu0 %v56
  %280 = vmatpush1.msra.mxu0 %v55
  %281 = vmatprep.subr.mxu0 %v59
  %282 = vmatpush1.msra.mxu0 %v58
  %283 = vmatprep.subr.mxu0 %v62
  %284 = vmatpush1.msra.mxu0 %v61
  %285 = vmatprep.subr.mxu0 %v65
  %286 = vmatpush1.msra.mxu0 %v64
  %287 = vmatprep.subr.mxu0 0.0
  %288 = vmatpush1.msra.mxu0 0.0
  %289 = vmatprep.subr.mxu0 0.0
  %290 = vmatpush1.msra.mxu0 0.0
  %291 = vmatprep.subr.mxu0 0.0
  %292 = vmatpush1.msra.mxu0 0.0
  %293 = vmatprep.subr.mxu0 0.0
  %294 = vmatpush1.msra.mxu0 0.0
  %295 = vmatprep.subr.mxu0 0.0
  %296 = vmatpush1.msra.mxu0 0.0
  %297 = vmatprep.subr.mxu0 0.0
  %298 = vmatpush1.msra.mxu0 0.0
  %299 = vmatprep.subr.mxu0 0.0
  %300 = vmatpush1.msra.mxu0 0.0
  %301 = vmatprep.subr.mxu0 0.0
  %302 = vmatpush1.msra.mxu0 0.0
  %303 = vmatprep.subr.mxu0 0.0
  %304 = vmatpush1.msra.mxu0 0.0
  %305 = vmatprep.subr.mxu0 0.0
  %306 = vmatpush1.msra.mxu0 0.0
  %307 = vmatprep.subr.mxu0 0.0
  %308 = vmatpush1.msra.mxu0 0.0
  %309 = vmatprep.subr.mxu0 0.0
  %310 = vmatpush1.msra.mxu0 0.0
  %311 = vmatprep.subr.mxu0 0.0
  %312 = vmatpush1.msra.mxu0 0.0
  %313 = vmatprep.subr.mxu0 0.0
  %314 = vmatpush1.msra.mxu0 0.0
  %315 = vmatprep.subr.mxu0 0.0
  %316 = vmatpush1.msra.mxu0 0.0
  %317 = vmatprep.subr.mxu0 0.0
  %318 = vmatpush1.msra.mxu0 0.0
  %319 = vmatprep.mubr.f32.mxu0 0.0
  %320 = vmatmul.mubr.f32.gmra.mrb[0].mxu0 %v249
  %v321 = vpop.f32.mrb[0].mxu0
  %v322 = vadd.f32 %v76, %v321
  %v323 = vpop.f32.mrb[0].mxu0
  %v324 = vadd.f32 %v80, %v323
  %325 = vdwg.mxu0
  %326 = vmatprep.subr.mxu0 0.0
  %327 = vmatpush1.msra.mxu0 %v21
  %328 = vmatprep.subr.mxu0 0.0
  %329 = vmatpush1.msra.mxu0 %v24
  %330 = vmatprep.subr.mxu0 0.0
  %331 = vmatpush1.msra.mxu0 %v27
  %332 = vmatprep.subr.mxu0 0.0
  %333 = vmatpush1.msra.mxu0 %v30
  %334 = vmatprep.subr.mxu0 0.0
  %335 = vmatpush1.msra.mxu0 %v33
  %336 = vmatprep.subr.mxu0 0.0
  %337 = vmatpush1.msra.mxu0 %v36
  %338 = vmatprep.subr.mxu0 0.0
  %339 = vmatpush1.msra.mxu0 %v39
  %340 = vmatprep.subr.mxu0 0.0
  %341 = vmatpush1.msra.mxu0 %v42
  %342 = vmatprep.subr.mxu0 0.0
  %343 = vmatpush1.msra.mxu0 %v45
  %344 = vmatprep.subr.mxu0 0.0
  %345 = vmatpush1.msra.mxu0 %v48
  %346 = vmatprep.subr.mxu0 0.0
  %347 = vmatpush1.msra.mxu0 %v51
  %348 = vmatprep.subr.mxu0 0.0
  %349 = vmatpush1.msra.mxu0 %v54
  %350 = vmatprep.subr.mxu0 0.0
  %351 = vmatpush1.msra.mxu0 %v57
  %352 = vmatprep.subr.mxu0 0.0
  %353 = vmatpush1.msra.mxu0 %v60
  %354 = vmatprep.subr.mxu0 0.0
  %355 = vmatpush1.msra.mxu0 %v63
  %356 = vmatprep.subr.mxu0 0.0
  %357 = vmatpush1.msra.mxu0 %v66
  %358 = vmatprep.subr.mxu0 0.0
  %359 = vmatpush1.msra.mxu0 0.0
  %360 = vmatprep.subr.mxu0 0.0
  %361 = vmatpush1.msra.mxu0 0.0
  %362 = vmatprep.subr.mxu0 0.0
  %363 = vmatpush1.msra.mxu0 0.0
  %364 = vmatprep.subr.mxu0 0.0
  %365 = vmatpush1.msra.mxu0 0.0
  %366 = vmatprep.subr.mxu0 0.0
  %367 = vmatpush1.msra.mxu0 0.0
  %368 = vmatprep.subr.mxu0 0.0
  %369 = vmatpush1.msra.mxu0 0.0
  %370 = vmatprep.subr.mxu0 0.0
  %371 = vmatpush1.msra.mxu0 0.0
  %372 = vmatprep.subr.mxu0 0.0
  %373 = vmatpush1.msra.mxu0 0.0
  %374 = vmatprep.subr.mxu0 0.0
  %375 = vmatpush1.msra.mxu0 0.0
  %376 = vmatprep.subr.mxu0 0.0
  %377 = vmatpush1.msra.mxu0 0.0
  %378 = vmatprep.subr.mxu0 0.0
  %379 = vmatpush1.msra.mxu0 0.0
  %380 = vmatprep.subr.mxu0 0.0
  %381 = vmatpush1.msra.mxu0 0.0
  %382 = vmatprep.subr.mxu0 0.0
  %383 = vmatpush1.msra.mxu0 0.0
  %384 = vmatprep.subr.mxu0 0.0
  %385 = vmatpush1.msra.mxu0 0.0
  %386 = vmatprep.subr.mxu0 0.0
  %387 = vmatpush1.msra.mxu0 0.0
  %388 = vmatprep.subr.mxu0 0.0
  %389 = vmatpush1.msra.mxu0 0.0
  %390 = vmatprep.mubr.f32.mxu0 0.0
  %391 = vmatmul.mubr.f32.gmra.mrb[0].mxu0 %v249
  %v392 = vpop.f32.mrb[0].mxu0
  %v393 = vadd.f32 %v84, %v392
  %v394 = vpop.f32.mrb[0].mxu0
  %395 = vdwg.mxu0
  %v396 = vadd.f32 %v252, %v322
  %v397 = vxor.u32 %v396, 2147483648
  %v398 = vmul.f32 %v397, 1.442695
  %v399 = vpow.pop %v398
  %v400 = vadd.f32 %v399, 1.0
  %v401 = vrcp.pop %v400
  %v402 = vmul.f32 1.0, %v401
  %v403 = vadd.f32 %v253, %v324
  %v404 = vxor.u32 %v403, 2147483648
  %v405 = vmul.f32 %v404, 1.442695
  %v406 = vpow.pop %v405
  %v407 = vadd.f32 %v406, 1.0
  %v408 = vrcp.pop %v407
  %v409 = vmul.f32 1.0, %v408
  %v410 = vmul.f32 %v402, %v393
  %v411 = vadd.f32 %v254, %v410
  %v412 = vtanh.pop %v411
  %v413 = vsub.f32 1.0, %v409
  %v414 = vmul.f32 %v413, %v412
  %v415 = vmul.f32 %v409, %v249
  %v416 = vadd.f32 %v414, %v415
  %s417 = scalar_lea.vmem %s3, 8
  %418 = vst [vmem:[%s417] sm:$0xff] %v416
  %s419 = scalar_lea.vmem %s0, 48
  %v420 = vld [vmem:[%s419] sm:$0xff]
  %v421 = vld [vmem:[%s419 + $0x8] sm:$0xff]
  %v422 = vld [vmem:[%s419 + $0x10] sm:$0xff]
  %423 = vmatprep.subr.mxu0 %v20
  %424 = vmatpush1.msra.mxu0 %v19
  %425 = vmatprep.subr.mxu0 %v23
  %426 = vmatpush1.msra.mxu0 %v22
  %427 = vmatprep.subr.mxu0 %v26
  %428 = vmatpush1.msra.mxu0 %v25
  %429 = vmatprep.subr.mxu0 %v29
  %430 = vmatpush1.msra.mxu0 %v28
  %431 = vmatprep.subr.mxu0 %v32
  %432 = vmatpush1.msra.mxu0 %v31
  %433 = vmatprep.subr.mxu0 %v35
  %434 = vmatpush1.msra.mxu0 %v34
  %435 = vmatprep.subr.mxu0 %v38
  %436 = vmatpush1.msra.mxu0 %v37
  %437 = vmatprep.subr.mxu0 %v41
  %438 = vmatpush1.msra.mxu0 %v40
  %439 = vmatprep.subr.mxu0 %v44
  %440 = vmatpush1.msra.mxu0 %v43
  %441 = vmatprep.subr.mxu0 %v47
  %442 = vmatpush1.msra.mxu0 %v46
  %443 = vmatprep.subr.mxu0 %v50
  %444 = vmatpush1.msra.mxu0 %v49
  %445 = vmatprep.subr.mxu0 %v53
  %446 = vmatpush1.msra.mxu0 %v52
  %447 = vmatprep.subr.mxu0 %v56
  %448 = vmatpush1.msra.mxu0 %v55
  %449 = vmatprep.subr.mxu0 %v59
  %450 = vmatpush1.msra.mxu0 %v58
  %451 = vmatprep.subr.mxu0 %v62
  %452 = vmatpush1.msra.mxu0 %v61
  %453 = vmatprep.subr.mxu0 %v65
  %454 = vmatpush1.msra.mxu0 %v64
  %455 = vmatprep.subr.mxu0 0.0
  %456 = vmatpush1.msra.mxu0 0.0
  %457 = vmatprep.subr.mxu0 0.0
  %458 = vmatpush1.msra.mxu0 0.0
  %459 = vmatprep.subr.mxu0 0.0
  %460 = vmatpush1.msra.mxu0 0.0
  %461 = vmatprep.subr.mxu0 0.0
  %462 = vmatpush1.msra.mxu0 0.0
  %463 = vmatprep.subr.mxu0 0.0
  %464 = vmatpush1.msra.mxu0 0.0
  %465 = vmatprep.subr.mxu0 0.0
  %466 = vmatpush1.msra.mxu0 0.0
  %467 = vmatprep.subr.mxu0 0.0
  %468 = vmatpush1.msra.mxu0 0.0
  %469 = vmatprep.subr.mxu0 0.0
  %470 = vmatpush1.msra.mxu0 0.0
  %471 = vmatprep.subr.mxu0 0.0
  %472 = vmatpush1.msra.mxu0 0.0
  %473 = vmatprep.subr.mxu0 0.0
  %474 = vmatpush1.msra.mxu0 0.0
  %475 = vmatprep.subr.mxu0 0.0
  %476 = vmatpush1.msra.mxu0 0.0
  %477 = vmatprep.subr.mxu0 0.0
  %478 = vmatpush1.msra.mxu0 0.0
  %479 = vmatprep.subr.mxu0 0.0
  %480 = vmatpush1.msra.mxu0 0.0
  %481 = vmatprep.subr.mxu0 0.0
  %482 = vmatpush1.msra.mxu0 0.0
  %483 = vmatprep.subr.mxu0 0.0
  %484 = vmatpush1.msra.mxu0 0.0
  %485 = vmatprep.subr.mxu0 0.0
  %486 = vmatpush1.msra.mxu0 0.0
  %487 = vmatprep.mubr.f32.mxu0 0.0
  %488 = vmatmul.mubr.f32.gmra.mrb[0].mxu0 %v416
  %v489 = vpop.f32.mrb[0].mxu0
  %v490 = vadd.f32 %v76, %v489
  %v491 = vpop.f32.mrb[0].mxu0
  %v492 = vadd.f32 %v80, %v491
  %493 = vdwg.mxu0
  %494 = vmatprep.subr.mxu0 0.0
  %495 = vmatpush1.msra.mxu0 %v21
  %496 = vmatprep.subr.mxu0 0.0
  %497 = vmatpush1.msra.mxu0 %v24
  %498 = vmatprep.subr.mxu0 0.0
  %499 = vmatpush1.msra.mxu0 %v27
  %500 = vmatprep.subr.mxu0 0.0
  %501 = vmatpush1.msra.mxu0 %v30
  %502 = vmatprep.subr.mxu0 0.0
  %503 = vmatpush1.msra.mxu0 %v33
  %504 = vmatprep.subr.mxu0 0.0
  %505 = vmatpush1.msra.mxu0 %v36
  %506 = vmatprep.subr.mxu0 0.0
  %507 = vmatpush1.msra.mxu0 %v39
  %508 = vmatprep.subr.mxu0 0.0
  %509 = vmatpush1.msra.mxu0 %v42
  %510 = vmatprep.subr.mxu0 0.0
  %511 = vmatpush1.msra.mxu0 %v45
  %512 = vmatprep.subr.mxu0 0.0
  %513 = vmatpush1.msra.mxu0 %v48
  %514 = vmatprep.subr.mxu0 0.0
  %515 = vmatpush1.msra.mxu0 %v51
  %516 = vmatprep.subr.mxu0 0.0
  %517 = vmatpush1.msra.mxu0 %v54
  %518 = vmatprep.subr.mxu0 0.0
  %519 = vmatpush1.msra.mxu0 %v57
  %520 = vmatprep.subr.mxu0 0.0
  %521 = vmatpush1.msra.mxu0 %v60
  %522 = vmatprep.subr.mxu0 0.0
  %523 = vmatpush1.msra.mxu0 %v63
  %524 = vmatprep.subr.mxu0 0.0
  %525 = vmatpush1.msra.mxu0 %v66
  %526 = vmatprep.subr.mxu0 0.0
  %527 = vmatpush1.msra.mxu0 0.0
  %528 = vmatprep.subr.mxu0 0.0
  %529 = vmatpush1.msra.mxu0 0.0
  %530 = vmatprep.subr.mxu0 0.0
  %531 = vmatpush1.msra.mxu0 0.0
  %532 = vmatprep.subr.mxu0 0.0
  %533 = vmatpush1.msra.mxu0 0.0
  %534 = vmatprep.subr.mxu0 0.0
  %535 = vmatpush1.msra.mxu0 0.0
  %536 = vmatprep.subr.mxu0 0.0
  %537 = vmatpush1.msra.mxu0 0.0
  %538 = vmatprep.subr.mxu0 0.0
  %539 = vmatpush1.msra.mxu0 0.0
  %540 = vmatprep.subr.mxu0 0.0
  %541 = vmatpush1.msra.mxu0 0.0
  %542 = vmatprep.subr.mxu0 0.0
  %543 = vmatpush1.msra.mxu0 0.0
  %544 = vmatprep.subr.mxu0 0.0
  %545 = vmatpush1.msra.mxu0 0.0
  %546 = vmatprep.subr.mxu0 0.0
  %547 = vmatpush1.msra.mxu0 0.0
  %548 = vmatprep.subr.mxu0 0.0
  %549 = vmatpush1.msra.mxu0 0.0
  %550 = vmatprep.subr.mxu0 0.0
  %551 = vmatpush1.msra.mxu0 0.0
  %552 = vmatprep.subr.mxu0 0.0
  %553 = vmatpush1.msra.mxu0 0.0
  %554 = vmatprep.subr.mxu0 0.0
  %555 = vmatpush1.msra.mxu0 0.0
  %556 = vmatprep.subr.mxu0 0.0
  %557 = vmatpush1.msra.mxu0 0.0
  %558 = vmatprep.mubr.f32.mxu0 0.0
  %559 = vmatmul.mubr.f32.gmra.mrb[0].mxu0 %v416
  %v560 = vpop.f32.mrb[0].mxu0
  %v561 = vadd.f32 %v84, %v560
  %v562 = vpop.f32.mrb[0].mxu0
  %563 = vdwg.mxu0
  %v564 = vadd.f32 %v420, %v490
  %v565 = vxor.u32 %v564, 2147483648
  %v566 = vmul.f32 %v565, 1.442695
  %v567 = vpow.pop %v566
  %v568 = vadd.f32 %v567, 1.0
  %v569 = vrcp.pop %v568
  %v570 = vmul.f32 1.0, %v569
  %v571 = vadd.f32 %v421, %v492
  %v572 = vxor.u32 %v571, 2147483648
  %v573 = vmul.f32 %v572, 1.442695
  %v574 = vpow.pop %v573
  %v575 = vadd.f32 %v574, 1.0
  %v576 = vrcp.pop %v575
  %v577 = vmul.f32 1.0, %v576
  %v578 = vmul.f32 %v570, %v561
  %v579 = vadd.f32 %v422, %v578
  %v580 = vtanh.pop %v579
  %v581 = vsub.f32 1.0, %v577
  %v582 = vmul.f32 %v581, %v580
  %v583 = vmul.f32 %v577, %v416
  %v584 = vadd.f32 %v582, %v583
  %s585 = scalar_lea.vmem %s3, 16
  %586 = vst [vmem:[%s585] sm:$0xff] %v584
  %s587 = scalar_lea.vmem %s0, 72
  %v588 = vld [vmem:[%s587] sm:$0xff]
  %v589 = vld [vmem:[%s587 + $0x8] sm:$0xff]
  %v590 = vld [vmem:[%s587 + $0x10] sm:$0xff]
  %591 = vmatprep.subr.mxu0 %v20
  %592 = vmatpush1.msra.mxu0 %v19
  %593 = vmatprep.subr.mxu0 %v23
  %594 = vmatpush1.msra.mxu0 %v22
  %595 = vmatprep.subr.mxu0 %v26
  %596 = vmatpush1.msra.mxu0 %v25
  %597 = vmatprep.subr.mxu0 %v29
  %598 = vmatpush1.msra.mxu0 %v28
  %599 = vmatprep.subr.mxu0 %v32
  %600 = vmatpush1.msra.mxu0 %v31
  %601 = vmatprep.subr.mxu0 %v35
  %602 = vmatpush1.msra.mxu0 %v34
  %603 = vmatprep.subr.mxu0 %v38
  %604 = vmatpush1.msra.mxu0 %v37
  %605 = vmatprep.subr.mxu0 %v41
  %606 = vmatpush1.msra.mxu0 %v40
  %607 = vmatprep.subr.mxu0 %v44
  %608 = vmatpush1.msra.mxu0 %v43
  %609 = vmatprep.subr.mxu0 %v47
  %610 = vmatpush1.msra.mxu0 %v46
  %611 = vmatprep.subr.mxu0 %v50
  %612 = vmatpush1.msra.mxu0 %v49
  %613 = vmatprep.subr.mxu0 %v53
  %614 = vmatpush1.msra.mxu0 %v52
  %615 = vmatprep.subr.mxu0 %v56
  %616 = vmatpush1.msra.mxu0 %v55
  %617 = vmatprep.subr.mxu0 %v59
  %618 = vmatpush1.msra.mxu0 %v58
  %619 = vmatprep.subr.mxu0 %v62
  %620 = vmatpush1.msra.mxu0 %v61
  %621 = vmatprep.subr.mxu0 %v65
  %622 = vmatpush1.msra.mxu0 %v64
  %623 = vmatprep.subr.mxu0 0.0
  %624 = vmatpush1.msra.mxu0 0.0
  %625 = vmatprep.subr.mxu0 0.0
  %626 = vmatpush1.msra.mxu0 0.0
  %627 = vmatprep.subr.mxu0 0.0
  %628 = vmatpush1.msra.mxu0 0.0
  %629 = vmatprep.subr.mxu0 0.0
  %630 = vmatpush1.msra.mxu0 0.0
  %631 = vmatprep.subr.mxu0 0.0
  %632 = vmatpush1.msra.mxu0 0.0
  %633 = vmatprep.subr.mxu0 0.0
  %634 = vmatpush1.msra.mxu0 0.0
  %635 = vmatprep.subr.mxu0 0.0
  %636 = vmatpush1.msra.mxu0 0.0
  %637 = vmatprep.subr.mxu0 0.0
  %638 = vmatpush1.msra.mxu0 0.0
  %639 = vmatprep.subr.mxu0 0.0
  %640 = vmatpush1.msra.mxu0 0.0
  %641 = vmatprep.subr.mxu0 0.0
  %642 = vmatpush1.msra.mxu0 0.0
  %643 = vmatprep.subr.mxu0 0.0
  %644 = vmatpush1.msra.mxu0 0.0
  %645 = vmatprep.subr.mxu0 0.0
  %646 = vmatpush1.msra.mxu0 0.0
  %647 = vmatprep.subr.mxu0 0.0
  %648 = vmatpush1.msra.mxu0 0.0
  %649 = vmatprep.subr.mxu0 0.0
  %650 = vmatpush1.msra.mxu0 0.0
  %651 = vmatprep.subr.mxu0 0.0
  %652 = vmatpush1.msra.mxu0 0.0
  %653 = vmatprep.subr.mxu0 0.0
  %654 = vmatpush1.msra.mxu0 0.0
  %655 = vmatprep.mubr.f32.mxu0 0.0
  %656 = vmatmul.mubr.f32.gmra.mrb[0].mxu0 %v584
  %v657 = vpop.f32.mrb[0].mxu0
  %v658 = vadd.f32 %v76, %v657
  %v659 = vpop.f32.mrb[0].mxu0
  %v660 = vadd.f32 %v80, %v659
  %661 = vdwg.mxu0
  %662 = vmatprep.subr.mxu0 0.0
  %663 = vmatpush1.msra.mxu0 %v21
  %664 = vmatprep.subr.mxu0 0.0
  %665 = vmatpush1.msra.mxu0 %v24
  %666 = vmatprep.subr.mxu0 0.0
  %667 = vmatpush1.msra.mxu0 %v27
  %668 = vmatprep.subr.mxu0 0.0
  %669 = vmatpush1.msra.mxu0 %v30
  %670 = vmatprep.subr.mxu0 0.0
  %671 = vmatpush1.msra.mxu0 %v33
  %672 = vmatprep.subr.mxu0 0.0
  %673 = vmatpush1.msra.mxu0 %v36
  %674 = vmatprep.subr.mxu0 0.0
  %675 = vmatpush1.msra.mxu0 %v39
  %676 = vmatprep.subr.mxu0 0.0
  %677 = vmatpush1.msra.mxu0 %v42
  %678 = vmatprep.subr.mxu0 0.0
  %679 = vmatpush1.msra.mxu0 %v45
  %680 = vmatprep.subr.mxu0 0.0
  %681 = vmatpush1.msra.mxu0 %v48
  %682 = vmatprep.subr.mxu0 0.0
  %683 = vmatpush1.msra.mxu0 %v51
  %684 = vmatprep.subr.mxu0 0.0
  %685 = vmatpush1.msra.mxu0 %v54
  %686 = vmatprep.subr.mxu0 0.0
  %687 = vmatpush1.msra.mxu0 %v57
  %688 = vmatprep.subr.mxu0 0.0
  %689 = vmatpush1.msra.mxu0 %v60
  %690 = vmatprep.subr.mxu0 0.0
  %691 = vmatpush1.msra.mxu0 %v63
  %692 = vmatprep.subr.mxu0 0.0
  %693 = vmatpush1.msra.mxu0 %v66
  %694 = vmatprep.subr.mxu0 0.0
  %695 = vmatpush1.msra.mxu0 0.0
  %696 = vmatprep.subr.mxu0 0.0
  %697 = vmatpush1.msra.mxu0 0.0
  %698 = vmatprep.subr.mxu0 0.0
  %699 = vmatpush1.msra.mxu0 0.0
  %700 = vmatprep.subr.mxu0 0.0
  %701 = vmatpush1.msra.mxu0 0.0
  %702 = vmatprep.subr.mxu0 0.0
  %703 = vmatpush1.msra.mxu0 0.0
  %704 = vmatprep.subr.mxu0 0.0
  %705 = vmatpush1.msra.mxu0 0.0
  %706 = vmatprep.subr.mxu0 0.0
  %707 = vmatpush1.msra.mxu0 0.0
  %708 = vmatprep.subr.mxu0 0.0
  %709 = vmatpush1.msra.mxu0 0.0
  %710 = vmatprep.subr.mxu0 0.0
  %711 = vmatpush1.msra.mxu0 0.0
  %712 = vmatprep.subr.mxu0 0.0
  %713 = vmatpush1.msra.mxu0 0.0
  %714 = vmatprep.subr.mxu0 0.0
  %715 = vmatpush1.msra.mxu0 0.0
  %716 = vmatprep.subr.mxu0 0.0
  %717 = vmatpush1.msra.mxu0 0.0
  %718 = vmatprep.subr.mxu0 0.0
  %719 = vmatpush1.msra.mxu0 0.0
  %720 = vmatprep.subr.mxu0 0.0
  %721 = vmatpush1.msra.mxu0 0.0
  %722 = vmatprep.subr.mxu0 0.0
  %723 = vmatpush1.msra.mxu0 0.0
  %724 = vmatprep.subr.mxu0 0.0
  %725 = vmatpush1.msra.mxu0 0.0
  %726 = vmatprep.mubr.f32.mxu0 0.0
  %727 = vmatmul.mubr.f32.gmra.mrb[0].mxu0 %v584
  %v728 = vpop.f32.mrb[0].mxu0
  %v729 = vadd.f32 %v84, %v728
  %v730 = vpop.f32.mrb[0].mxu0
  %731 = vdwg.mxu0
  %v732 = vadd.f32 %v588, %v658
  %v733 = vxor.u32 %v732, 2147483648
  %v734 = vmul.f32 %v733, 1.442695
  %v735 = vpow.pop %v734
  %v736 = vadd.f32 %v735, 1.0
  %v737 = vrcp.pop %v736
  %v738 = vmul.f32 1.0, %v737
  %v739 = vadd.f32 %v589, %v660
  %v740 = vxor.u32 %v739, 2147483648
  %v741 = vmul.f32 %v740, 1.442695
  %v742 = vpow.pop %v741
  %v743 = vadd.f32 %v742, 1.0
  %v744 = vrcp.pop %v743
  %v745 = vmul.f32 1.0, %v744
  %v746 = vmul.f32 %v738, %v729
  %v747 = vadd.f32 %v590, %v746
  %v748 = vtanh.pop %v747
  %v749 = vsub.f32 1.0, %v745
  %v750 = vmul.f32 %v749, %v748
  %v751 = vmul.f32 %v745, %v584
  %v752 = vadd.f32 %v750, %v751
  %s753 = scalar_lea.vmem %s3, 24
  %754 = vst [vmem:[%s753] sm:$0xff] %v752
  %s755 = scalar_lea.vmem %s0, 96
  %v756 = vld [vmem:[%s755] sm:$0xff]
  %v757 = vld [vmem:[%s755 + $0x8] sm:$0xff]
  %v758 = vld [vmem:[%s755 + $0x10] sm:$0xff]
  %759 = vmatprep.subr.mxu0 %v20
  %760 = vmatpush1.msra.mxu0 %v19
  %761 = vmatprep.subr.mxu0 %v23
  %762 = vmatpush1.msra.mxu0 %v22
  %763 = vmatprep.subr.mxu0 %v26
  %764 = vmatpush1.msra.mxu0 %v25
  %765 = vmatprep.subr.mxu0 %v29
  %766 = vmatpush1.msra.mxu0 %v28
  %767 = vmatprep.subr.mxu0 %v32
  %768 = vmatpush1.msra.mxu0 %v31
  %769 = vmatprep.subr.mxu0 %v35
  %770 = vmatpush1.msra.mxu0 %v34
  %771 = vmatprep.subr.mxu0 %v38
  %772 = vmatpush1.msra.mxu0 %v37
  %773 = vmatprep.subr.mxu0 %v41
  %774 = vmatpush1.msra.mxu0 %v40
  %775 = vmatprep.subr.mxu0 %v44
  %776 = vmatpush1.msra.mxu0 %v43
  %777 = vmatprep.subr.mxu0 %v47
  %778 = vmatpush1.msra.mxu0 %v46
  %779 = vmatprep.subr.mxu0 %v50
  %780 = vmatpush1.msra.mxu0 %v49
  %781 = vmatprep.subr.mxu0 %v53
  %782 = vmatpush1.msra.mxu0 %v52
  %783 = vmatprep.subr.mxu0 %v56
  %784 = vmatpush1.msra.mxu0 %v55
  %785 = vmatprep.subr.mxu0 %v59
  %786 = vmatpush1.msra.mxu0 %v58
  %787 = vmatprep.subr.mxu0 %v62
  %788 = vmatpush1.msra.mxu0 %v61
  %789 = vmatprep.subr.mxu0 %v65
  %790 = vmatpush1.msra.mxu0 %v64
  %791 = vmatprep.subr.mxu0 0.0
  %792 = vmatpush1.msra.mxu0 0.0
  %793 = vmatprep.subr.mxu0 0.0
  %794 = vmatpush1.msra.mxu0 0.0
  %795 = vmatprep.subr.mxu0 0.0
  %796 = vmatpush1.msra.mxu0 0.0
  %797 = vmatprep.subr.mxu0 0.0
  %798 = vmatpush1.msra.mxu0 0.0
  %799 = vmatprep.subr.mxu0 0.0
  %800 = vmatpush1.msra.mxu0 0.0
  %801 = vmatprep.subr.mxu0 0.0
  %802 = vmatpush1.msra.mxu0 0.0
  %803 = vmatprep.subr.mxu0 0.0
  %804 = vmatpush1.msra.mxu0 0.0
  %805 = vmatprep.subr.mxu0 0.0
  %806 = vmatpush1.msra.mxu0 0.0
  %807 = vmatprep.subr.mxu0 0.0
  %808 = vmatpush1.msra.mxu0 0.0
  %809 = vmatprep.subr.mxu0 0.0
  %810 = vmatpush1.msra.mxu0 0.0
  %811 = vmatprep.subr.mxu0 0.0
  %812 = vmatpush1.msra.mxu0 0.0
  %813 = vmatprep.subr.mxu0 0.0
  %814 = vmatpush1.msra.mxu0 0.0
  %815 = vmatprep.subr.mxu0 0.0
  %816 = vmatpush1.msra.mxu0 0.0
  %817 = vmatprep.subr.mxu0 0.0
  %818 = vmatpush1.msra.mxu0 0.0
  %819 = vmatprep.subr.mxu0 0.0
  %820 = vmatpush1.msra.mxu0 0.0
  %821 = vmatprep.subr.mxu0 0.0
  %822 = vmatpush1.msra.mxu0 0.0
  %823 = vmatprep.mubr.f32.mxu0 0.0
  %824 = vmatmul.mubr.f32.gmra.mrb[0].mxu0 %v752
  %v825 = vpop.f32.mrb[0].mxu0
  %v826 = vadd.f32 %v76, %v825
  %v827 = vpop.f32.mrb[0].mxu0
  %v828 = vadd.f32 %v80, %v827
  %829 = vdwg.mxu0
  %830 = vmatprep.subr.mxu0 0.0
  %831 = vmatpush1.msra.mxu0 %v21
  %832 = vmatprep.subr.mxu0 0.0
  %833 = vmatpush1.msra.mxu0 %v24
  %834 = vmatprep.subr.mxu0 0.0
  %835 = vmatpush1.msra.mxu0 %v27
  %836 = vmatprep.subr.mxu0 0.0
  %837 = vmatpush1.msra.mxu0 %v30
  %838 = vmatprep.subr.mxu0 0.0
  %839 = vmatpush1.msra.mxu0 %v33
  %840 = vmatprep.subr.mxu0 0.0
  %841 = vmatpush1.msra.mxu0 %v36
  %842 = vmatprep.subr.mxu0 0.0
  %843 = vmatpush1.msra.mxu0 %v39
  %844 = vmatprep.subr.mxu0 0.0
  %845 = vmatpush1.msra.mxu0 %v42
  %846 = vmatprep.subr.mxu0 0.0
  %847 = vmatpush1.msra.mxu0 %v45
  %848 = vmatprep.subr.mxu0 0.0
  %849 = vmatpush1.msra.mxu0 %v48
  %850 = vmatprep.subr.mxu0 0.0
  %851 = vmatpush1.msra.mxu0 %v51
  %852 = vmatprep.subr.mxu0 0.0
  %853 = vmatpush1.msra.mxu0 %v54
  %854 = vmatprep.subr.mxu0 0.0
  %855 = vmatpush1.msra.mxu0 %v57
  %856 = vmatprep.subr.mxu0 0.0
  %857 = vmatpush1.msra.mxu0 %v60
  %858 = vmatprep.subr.mxu0 0.0
  %859 = vmatpush1.msra.mxu0 %v63
  %860 = vmatprep.subr.mxu0 0.0
  %861 = vmatpush1.msra.mxu0 %v66
  %862 = vmatprep.subr.mxu0 0.0
  %863 = vmatpush1.msra.mxu0 0.0
  %864 = vmatprep.subr.mxu0 0.0
  %865 = vmatpush1.msra.mxu0 0.0
  %866 = vmatprep.subr.mxu0 0.0
  %867 = vmatpush1.msra.mxu0 0.0
  %868 = vmatprep.subr.mxu0 0.0
  %869 = vmatpush1.msra.mxu0 0.0
  %870 = vmatprep.subr.mxu0 0.0
  %871 = vmatpush1.msra.mxu0 0.0
  %872 = vmatprep.subr.mxu0 0.0
  %873 = vmatpush1.msra.mxu0 0.0
  %874 = vmatprep.subr.mxu0 0.0
  %875 = vmatpush1.msra.mxu0 0.0
  %876 = vmatprep.subr.mxu0 0.0
  %877 = vmatpush1.msra.mxu0 0.0
  %878 = vmatprep.subr.mxu0 0.0
  %879 = vmatpush1.msra.mxu0 0.0
  %880 = vmatprep.subr.mxu0 0.0
  %881 = vmatpush1.msra.mxu0 0.0
  %882 = vmatprep.subr.mxu0 0.0
  %883 = vmatpush1.msra.mxu0 0.0
  %884 = vmatprep.subr.mxu0 0.0
  %885 = vmatpush1.msra.mxu0 0.0
  %886 = vmatprep.subr.mxu0 0.0
  %887 = vmatpush1.msra.mxu0 0.0
  %888 = vmatprep.subr.mxu0 0.0
  %889 = vmatpush1.msra.mxu0 0.0
  %890 = vmatprep.subr.mxu0 0.0
  %891 = vmatpush1.msra.mxu0 0.0
  %892 = vmatprep.subr.mxu0 0.0
  %893 = vmatpush1.msra.mxu0 0.0
  %894 = vmatprep.mubr.f32.mxu0 0.0
  %895 = vmatmul.mubr.f32.gmra.mrb[0].mxu0 %v752
  %v896 = vpop.f32.mrb[0].mxu0
  %v897 = vadd.f32 %v84, %v896
  %v898 = vpop.f32.mrb[0].mxu0
  %899 = vdwg.mxu0
  %v900 = vadd.f32 %v756, %v826
  %v901 = vxor.u32 %v900, 2147483648
  %v902 = vmul.f32 %v901, 1.442695
  %v903 = vpow.pop %v902
  %v904 = vadd.f32 %v903, 1.0
  %v905 = vrcp.pop %v904
  %v906 = vmul.f32 1.0, %v905
  %v907 = vadd.f32 %v757, %v828
  %v908 = vxor.u32 %v907, 2147483648
  %v909 = vmul.f32 %v908, 1.442695
  %v910 = vpow.pop %v909
  %v911 = vadd.f32 %v910, 1.0
  %v912 = vrcp.pop %v911
  %v913 = vmul.f32 1.0, %v912
  %v914 = vmul.f32 %v906, %v897
  %v915 = vadd.f32 %v758, %v914
  %v916 = vtanh.pop %v915
  %v917 = vsub.f32 1.0, %v913
  %v918 = vmul.f32 %v917, %v916
  %v919 = vmul.f32 %v913, %v752
  %v920 = vadd.f32 %v918, %v919
  %s921 = scalar_lea.vmem %s3, 32
  %922 = vst [vmem:[%s921] sm:$0xff] %v920
  %s923 = scalar_lea.vmem %s0, 120
  %v924 = vld [vmem:[%s923] sm:$0xff]
  %v925 = vld [vmem:[%s923 + $0x8] sm:$0xff]
  %v926 = vld [vmem:[%s923 + $0x10] sm:$0xff]
  %927 = vmatprep.subr.mxu0 %v20
  %928 = vmatpush1.msra.mxu0 %v19
  %929 = vmatprep.subr.mxu0 %v23
  %930 = vmatpush1.msra.mxu0 %v22
  %931 = vmatprep.subr.mxu0 %v26
  %932 = vmatpush1.msra.mxu0 %v25
  %933 = vmatprep.subr.mxu0 %v29
  %934 = vmatpush1.msra.mxu0 %v28
  %935 = vmatprep.subr.mxu0 %v32
  %936 = vmatpush1.msra.mxu0 %v31
  %937 = vmatprep.subr.mxu0 %v35
  %938 = vmatpush1.msra.mxu0 %v34
  %939 = vmatprep.subr.mxu0 %v38
  %940 = vmatpush1.msra.mxu0 %v37
  %941 = vmatprep.subr.mxu0 %v41
  %942 = vmatpush1.msra.mxu0 %v40
  %943 = vmatprep.subr.mxu0 %v44
  %944 = vmatpush1.msra.mxu0 %v43
  %945 = vmatprep.subr.mxu0 %v47
  %946 = vmatpush1.msra.mxu0 %v46
  %947 = vmatprep.subr.mxu0 %v50
  %948 = vmatpush1.msra.mxu0 %v49
  %949 = vmatprep.subr.mxu0 %v53
  %950 = vmatpush1.msra.mxu0 %v52
  %951 = vmatprep.subr.mxu0 %v56
  %952 = vmatpush1.msra.mxu0 %v55
  %953 = vmatprep.subr.mxu0 %v59
  %954 = vmatpush1.msra.mxu0 %v58
  %955 = vmatprep.subr.mxu0 %v62
  %956 = vmatpush1.msra.mxu0 %v61
  %957 = vmatprep.subr.mxu0 %v65
  %958 = vmatpush1.msra.mxu0 %v64
  %959 = vmatprep.subr.mxu0 0.0
  %960 = vmatpush1.msra.mxu0 0.0
  %961 = vmatprep.subr.mxu0 0.0
  %962 = vmatpush1.msra.mxu0 0.0
  %963 = vmatprep.subr.mxu0 0.0
  %964 = vmatpush1.msra.mxu0 0.0
  %965 = vmatprep.subr.mxu0 0.0
  %966 = vmatpush1.msra.mxu0 0.0
  %967 = vmatprep.subr.mxu0 0.0
  %968 = vmatpush1.msra.mxu0 0.0
  %969 = vmatprep.subr.mxu0 0.0
  %970 = vmatpush1.msra.mxu0 0.0
  %971 = vmatprep.subr.mxu0 0.0
  %972 = vmatpush1.msra.mxu0 0.0
  %973 = vmatprep.subr.mxu0 0.0
  %974 = vmatpush1.msra.mxu0 0.0
  %975 = vmatprep.subr.mxu0 0.0
  %976 = vmatpush1.msra.mxu0 0.0
  %977 = vmatprep.subr.mxu0 0.0
  %978 = vmatpush1.msra.mxu0 0.0
  %979 = vmatprep.subr.mxu0 0.0
  %980 = vmatpush1.msra.mxu0 0.0
  %981 = vmatprep.subr.mxu0 0.0
  %982 = vmatpush1.msra.mxu0 0.0
  %983 = vmatprep.subr.mxu0 0.0
  %984 = vmatpush1.msra.mxu0 0.0
  %985 = vmatprep.subr.mxu0 0.0
  %986 = vmatpush1.msra.mxu0 0.0
  %987 = vmatprep.subr.mxu0 0.0
  %988 = vmatpush1.msra.mxu0 0.0
  %989 = vmatprep.subr.mxu0 0.0
  %990 = vmatpush1.msra.mxu0 0.0
  %991 = vmatprep.mubr.f32.mxu0 0.0
  %992 = vmatmul.mubr.f32.gmra.mrb[0].mxu0 %v920
  %v993 = vpop.f32.mrb[0].mxu0
  %v994 = vadd.f32 %v76, %v993
  %v995 = vpop.f32.mrb[0].mxu0
  %v996 = vadd.f32 %v80, %v995
  %997 = vdwg.mxu0
  %998 = vmatprep.subr.mxu0 0.0
  %999 = vmatpush1.msra.mxu0 %v21
  %1000 = vmatprep.subr.mxu0 0.0
  %1001 = vmatpush1.msra.mxu0 %v24
  %1002 = vmatprep.subr.mxu0 0.0
  %1003 = vmatpush1.msra.mxu0 %v27
  %1004 = vmatprep.subr.mxu0 0.0
  %1005 = vmatpush1.msra.mxu0 %v30
  %1006 = vmatprep.subr.mxu0 0.0
  %1007 = vmatpush1.msra.mxu0 %v33
  %1008 = vmatprep.subr.mxu0 0.0
  %1009 = vmatpush1.msra.mxu0 %v36
  %1010 = vmatprep.subr.mxu0 0.0
  %1011 = vmatpush1.msra.mxu0 %v39
  %1012 = vmatprep.subr.mxu0 0.0
  %1013 = vmatpush1.msra.mxu0 %v42
  %1014 = vmatprep.subr.mxu0 0.0
  %1015 = vmatpush1.msra.mxu0 %v45
  %1016 = vmatprep.subr.mxu0 0.0
  %1017 = vmatpush1.msra.mxu0 %v48
  %1018 = vmatprep.subr.mxu0 0.0
  %1019 = vmatpush1.msra.mxu0 %v51
  %1020 = vmatprep.subr.mxu0 0.0
  %1021 = vmatpush1.msra.mxu0 %v54
  %1022 = vmatprep.subr.mxu0 0.0
  %1023 = vmatpush1.msra.mxu0 %v57
  %1024 = vmatprep.subr.mxu0 0.0
  %1025 = vmatpush1.msra.mxu0 %v60
  %1026 = vmatprep.subr.mxu0 0.0
  %1027 = vmatpush1.msra.mxu0 %v63
  %1028 = vmatprep.subr.mxu0 0.0
  %1029 = vmatpush1.msra.mxu0 %v66
  %1030 = vmatprep.subr.mxu0 0.0
  %1031 = vmatpush1.msra.mxu0 0.0
  %1032 = vmatprep.subr.mxu0 0.0
  %1033 = vmatpush1.msra.mxu0 0.0
  %1034 = vmatprep.subr.mxu0 0.0
  %1035 = vmatpush1.msra.mxu0 0.0
  %1036 = vmatprep.subr.mxu0 0.0
  %1037 = vmatpush1.msra.mxu0 0.0
  %1038 = vmatprep.subr.mxu0 0.0
  %1039 = vmatpush1.msra.mxu0 0.0
  %1040 = vmatprep.subr.mxu0 0.0
  %1041 = vmatpush1.msra.mxu0 0.0
  %1042 = vmatprep.subr.mxu0 0.0
  %1043 = vmatpush1.msra.mxu0 0.0
  %1044 = vmatprep.subr.mxu0 0.0
  %1045 = vmatpush1.msra.mxu0 0.0
  %1046 = vmatprep.subr.mxu0 0.0
  %1047 = vmatpush1.msra.mxu0 0.0
  %1048 = vmatprep.subr.mxu0 0.0
  %1049 = vmatpush1.msra.mxu0 0.0
  %1050 = vmatprep.subr.mxu0 0.0
  %1051 = vmatpush1.msra.mxu0 0.0
  %1052 = vmatprep.subr.mxu0 0.0
  %1053 = vmatpush1.msra.mxu0 0.0
  %1054 = vmatprep.subr.mxu0 0.0
  %1055 = vmatpush1.msra.mxu0 0.0
  %1056 = vmatprep.subr.mxu0 0.0
  %1057 = vmatpush1.msra.mxu0 0.0
  %1058 = vmatprep.subr.mxu0 0.0
  %1059 = vmatpush1.msra.mxu0 0.0
  %1060 = vmatprep.subr.mxu0 0.0
  %1061 = vmatpush1.msra.mxu0 0.0
  %1062 = vmatprep.mubr.f32.mxu0 0.0
  %1063 = vmatmul.mubr.f32.gmra.mrb[0].mxu0 %v920
  %v1064 = vpop.f32.mrb[0].mxu0
  %v1065 = vadd.f32 %v84, %v1064
  %v1066 = vpop.f32.mrb[0].mxu0
  %1067 = vdwg.mxu0
  %v1068 = vadd.f32 %v924, %v994
  %v1069 = vxor.u32 %v1068, 2147483648
  %v1070 = vmul.f32 %v1069, 1.442695
  %v1071 = vpow.pop %v1070
  %v1072 = vadd.f32 %v1071, 1.0
  %v1073 = vrcp.pop %v1072
  %v1074 = vmul.f32 1.0, %v1073
  %v1075 = vadd.f32 %v925, %v996
  %v1076 = vxor.u32 %v1075, 2147483648
  %v1077 = vmul.f32 %v1076, 1.442695
  %v1078 = vpow.pop %v1077
  %v1079 = vadd.f32 %v1078, 1.0
  %v1080 = vrcp.pop %v1079
  %v1081 = vmul.f32 1.0, %v1080
  %v1082 = vmul.f32 %v1074, %v1065
  %v1083 = vadd.f32 %v926, %v1082
  %v1084 = vtanh.pop %v1083
  %v1085 = vsub.f32 1.0, %v1081
  %v1086 = vmul.f32 %v1085, %v1084
  %v1087 = vmul.f32 %v1081, %v920
  %v1088 = vadd.f32 %v1086, %v1087
  %s1089 = scalar_lea.vmem %s3, 40
  %1090 = vst [vmem:[%s1089] sm:$0xff] %v1088
  %s1091 = scalar_lea.vmem %s0, 144
  %v1092 = vld [vmem:[%s1091] sm:$0xff]
  %v1093 = vld [vmem:[%s1091 + $0x8] sm:$0xff]
  %v1094 = vld [vmem:[%s1091 + $0x10] sm:$0xff]
  %1095 = vmatprep.subr.mxu0 %v20
  %1096 = vmatpush1.msra.mxu0 %v19
  %1097 = vmatprep.subr.mxu0 %v23
  %1098 = vmatpush1.msra.mxu0 %v22
  %1099 = vmatprep.subr.mxu0 %v26
  %1100 = vmatpush1.msra.mxu0 %v25
  %1101 = vmatprep.subr.mxu0 %v29
  %1102 = vmatpush1.msra.mxu0 %v28
  %1103 = vmatprep.subr.mxu0 %v32
  %1104 = vmatpush1.msra.mxu0 %v31
  %1105 = vmatprep.subr.mxu0 %v35
  %1106 = vmatpush1.msra.mxu0 %v34
  %1107 = vmatprep.subr.mxu0 %v38
  %1108 = vmatpush1.msra.mxu0 %v37
  %1109 = vmatprep.subr.mxu0 %v41
  %1110 = vmatpush1.msra.mxu0 %v40
  %1111 = vmatprep.subr.mxu0 %v44
  %1112 = vmatpush1.msra.mxu0 %v43
  %1113 = vmatprep.subr.mxu0 %v47
  %1114 = vmatpush1.msra.mxu0 %v46
  %1115 = vmatprep.subr.mxu0 %v50
  %1116 = vmatpush1.msra.mxu0 %v49
  %1117 = vmatprep.subr.mxu0 %v53
  %1118 = vmatpush1.msra.mxu0 %v52
  %1119 = vmatprep.subr.mxu0 %v56
  %1120 = vmatpush1.msra.mxu0 %v55
  %1121 = vmatprep.subr.mxu0 %v59
  %1122 = vmatpush1.msra.mxu0 %v58
  %1123 = vmatprep.subr.mxu0 %v62
  %1124 = vmatpush1.msra.mxu0 %v61
  %1125 = vmatprep.subr.mxu0 %v65
  %1126 = vmatpush1.msra.mxu0 %v64
  %1127 = vmatprep.subr.mxu0 0.0
  %1128 = vmatpush1.msra.mxu0 0.0
  %1129 = vmatprep.subr.mxu0 0.0
  %1130 = vmatpush1.msra.mxu0 0.0
  %1131 = vmatprep.subr.mxu0 0.0
  %1132 = vmatpush1.msra.mxu0 0.0
  %1133 = vmatprep.subr.mxu0 0.0
  %1134 = vmatpush1.msra.mxu0 0.0
  %1135 = vmatprep.subr.mxu0 0.0
  %1136 = vmatpush1.msra.mxu0 0.0
  %1137 = vmatprep.subr.mxu0 0.0
  %1138 = vmatpush1.msra.mxu0 0.0
  %1139 = vmatprep.subr.mxu0 0.0
  %1140 = vmatpush1.msra.mxu0 0.0
  %1141 = vmatprep.subr.mxu0 0.0
  %1142 = vmatpush1.msra.mxu0 0.0
  %1143 = vmatprep.subr.mxu0 0.0
  %1144 = vmatpush1.msra.mxu0 0.0
  %1145 = vmatprep.subr.mxu0 0.0
  %1146 = vmatpush1.msra.mxu0 0.0
  %1147 = vmatprep.subr.mxu0 0.0
  %1148 = vmatpush1.msra.mxu0 0.0
  %1149 = vmatprep.subr.mxu0 0.0
  %1150 = vmatpush1.msra.mxu0 0.0
  %1151 = vmatprep.subr.mxu0 0.0
  %1152 = vmatpush1.msra.mxu0 0.0
  %1153 = vmatprep.subr.mxu0 0.0
  %1154 = vmatpush1.msra.mxu0 0.0
  %1155 = vmatprep.subr.mxu0 0.0
  %1156 = vmatpush1.msra.mxu0 0.0
  %1157 = vmatprep.subr.mxu0 0.0
  %1158 = vmatpush1.msra.mxu0 0.0
  %1159 = vmatprep.mubr.f32.mxu0 0.0
  %1160 = vmatmul.mubr.f32.gmra.mrb[0].mxu0 %v1088
  %v1161 = vpop.f32.mrb[0].mxu0
  %v1162 = vadd.f32 %v76, %v1161
  %v1163 = vpop.f32.mrb[0].mxu0
  %v1164 = vadd.f32 %v80, %v1163
  %1165 = vdwg.mxu0
  %1166 = vmatprep.subr.mxu0 0.0
  %1167 = vmatpush1.msra.mxu0 %v21
  %1168 = vmatprep.subr.mxu0 0.0
  %1169 = vmatpush1.msra.mxu0 %v24
  %1170 = vmatprep.subr.mxu0 0.0
  %1171 = vmatpush1.msra.mxu0 %v27
  %1172 = vmatprep.subr.mxu0 0.0
  %1173 = vmatpush1.msra.mxu0 %v30
  %1174 = vmatprep.subr.mxu0 0.0
  %1175 = vmatpush1.msra.mxu0 %v33
  %1176 = vmatprep.subr.mxu0 0.0
  %1177 = vmatpush1.msra.mxu0 %v36
  %1178 = vmatprep.subr.mxu0 0.0
  %1179 = vmatpush1.msra.mxu0 %v39
  %1180 = vmatprep.subr.mxu0 0.0
  %1181 = vmatpush1.msra.mxu0 %v42
  %1182 = vmatprep.subr.mxu0 0.0
  %1183 = vmatpush1.msra.mxu0 %v45
  %1184 = vmatprep.subr.mxu0 0.0
  %1185 = vmatpush1.msra.mxu0 %v48
  %1186 = vmatprep.subr.mxu0 0.0
  %1187 = vmatpush1.msra.mxu0 %v51
  %1188 = vmatprep.subr.mxu0 0.0
  %1189 = vmatpush1.msra.mxu0 %v54
  %1190 = vmatprep.subr.mxu0 0.0
  %1191 = vmatpush1.msra.mxu0 %v57
  %1192 = vmatprep.subr.mxu0 0.0
  %1193 = vmatpush1.msra.mxu0 %v60
  %1194 = vmatprep.subr.mxu0 0.0
  %1195 = vmatpush1.msra.mxu0 %v63
  %1196 = vmatprep.subr.mxu0 0.0
  %1197 = vmatpush1.msra.mxu0 %v66
  %1198 = vmatprep.subr.mxu0 0.0
  %1199 = vmatpush1.msra.mxu0 0.0
  %1200 = vmatprep.subr.mxu0 0.0
  %1201 = vmatpush1.msra.mxu0 0.0
  %1202 = vmatprep.subr.mxu0 0.0
  %1203 = vmatpush1.msra.mxu0 0.0
  %1204 = vmatprep.subr.mxu0 0.0
  %1205 = vmatpush1.msra.mxu0 0.0
  %1206 = vmatprep.subr.mxu0 0.0
  %1207 = vmatpush1.msra.mxu0 0.0
  %1208 = vmatprep.subr.mxu0 0.0
  %1209 = vmatpush1.msra.mxu0 0.0
  %1210 = vmatprep.subr.mxu0 0.0
  %1211 = vmatpush1.msra.mxu0 0.0
  %1212 = vmatprep.subr.mxu0 0.0
  %1213 = vmatpush1.msra.mxu0 0.0
  %1214 = vmatprep.subr.mxu0 0.0
  %1215 = vmatpush1.msra.mxu0 0.0
  %1216 = vmatprep.subr.mxu0 0.0
  %1217 = vmatpush1.msra.mxu0 0.0
  %1218 = vmatprep.subr.mxu0 0.0
  %1219 = vmatpush1.msra.mxu0 0.0
  %1220 = vmatprep.subr.mxu0 0.0
  %1221 = vmatpush1.msra.mxu0 0.0
  %1222 = vmatprep.subr.mxu0 0.0
  %1223 = vmatpush1.msra.mxu0 0.0
  %1224 = vmatprep.subr.mxu0 0.0
  %1225 = vmatpush1.msra.mxu0 0.0
  %1226 = vmatprep.subr.mxu0 0.0
  %1227 = vmatpush1.msra.mxu0 0.0
  %1228 = vmatprep.subr.mxu0 0.0
  %1229 = vmatpush1.msra.mxu0 0.0
  %1230 = vmatprep.mubr.f32.mxu0 0.0
  %1231 = vmatmul.mubr.f32.gmra.mrb[0].mxu0 %v1088
  %v1232 = vpop.f32.mrb[0].mxu0
  %v1233 = vadd.f32 %v84, %v1232
  %v1234 = vpop.f32.mrb[0].mxu0
  %1235 = vdwg.mxu0
  %v1236 = vadd.f32 %v1092, %v1162
  %v1237 = vxor.u32 %v1236, 2147483648
  %v1238 = vmul.f32 %v1237, 1.442695
  %v1239 = vpow.pop %v1238
  %v1240 = vadd.f32 %v1239, 1.0
  %v1241 = vrcp.pop %v1240
  %v1242 = vmul.f32 1.0, %v1241
  %v1243 = vadd.f32 %v1093, %v1164
  %v1244 = vxor.u32 %v1243, 2147483648
  %v1245 = vmul.f32 %v1244, 1.442695
  %v1246 = vpow.pop %v1245
  %v1247 = vadd.f32 %v1246, 1.0
  %v1248 = vrcp.pop %v1247
  %v1249 = vmul.f32 1.0, %v1248
  %v1250 = vmul.f32 %v1242, %v1233
  %v1251 = vadd.f32 %v1094, %v1250
  %v1252 = vtanh.pop %v1251
  %v1253 = vsub.f32 1.0, %v1249
  %v1254 = vmul.f32 %v1253, %v1252
  %v1255 = vmul.f32 %v1249, %v1088
  %v1256 = vadd.f32 %v1254, %v1255
  %s1257 = scalar_lea.vmem %s3, 48
  %1258 = vst [vmem:[%s1257] sm:$0xff] %v1256
  %s1259 = scalar_lea.vmem %s0, 168
  %v1260 = vld [vmem:[%s1259] sm:$0xff]
  %v1261 = vld [vmem:[%s1259 + $0x8] sm:$0xff]
  %v1262 = vld [vmem:[%s1259 + $0x10] sm:$0xff]
  %1263 = vmatprep.subr.mxu0 %v20
  %1264 = vmatpush1.msra.mxu0 %v19
  %1265 = vmatprep.subr.mxu0 %v23
  %1266 = vmatpush1.msra.mxu0 %v22
  %1267 = vmatprep.subr.mxu0 %v26
  %1268 = vmatpush1.msra.mxu0 %v25
  %1269 = vmatprep.subr.mxu0 %v29
  %1270 = vmatpush1.msra.mxu0 %v28
  %1271 = vmatprep.subr.mxu0 %v32
  %1272 = vmatpush1.msra.mxu0 %v31
  %1273 = vmatprep.subr.mxu0 %v35
  %1274 = vmatpush1.msra.mxu0 %v34
  %1275 = vmatprep.subr.mxu0 %v38
  %1276 = vmatpush1.msra.mxu0 %v37
  %1277 = vmatprep.subr.mxu0 %v41
  %1278 = vmatpush1.msra.mxu0 %v40
  %1279 = vmatprep.subr.mxu0 %v44
  %1280 = vmatpush1.msra.mxu0 %v43
  %1281 = vmatprep.subr.mxu0 %v47
  %1282 = vmatpush1.msra.mxu0 %v46
  %1283 = vmatprep.subr.mxu0 %v50
  %1284 = vmatpush1.msra.mxu0 %v49
  %1285 = vmatprep.subr.mxu0 %v53
  %1286 = vmatpush1.msra.mxu0 %v52
  %1287 = vmatprep.subr.mxu0 %v56
  %1288 = vmatpush1.msra.mxu0 %v55
  %1289 = vmatprep.subr.mxu0 %v59
  %1290 = vmatpush1.msra.mxu0 %v58
  %1291 = vmatprep.subr.mxu0 %v62
  %1292 = vmatpush1.msra.mxu0 %v61
  %1293 = vmatprep.subr.mxu0 %v65
  %1294 = vmatpush1.msra.mxu0 %v64
  %1295 = vmatprep.subr.mxu0 0.0
  %1296 = vmatpush1.msra.mxu0 0.0
  %1297 = vmatprep.subr.mxu0 0.0
  %1298 = vmatpush1.msra.mxu0 0.0
  %1299 = vmatprep.subr.mxu0 0.0
  %1300 = vmatpush1.msra.mxu0 0.0
  %1301 = vmatprep.subr.mxu0 0.0
  %1302 = vmatpush1.msra.mxu0 0.0
  %1303 = vmatprep.subr.mxu0 0.0
  %1304 = vmatpush1.msra.mxu0 0.0
  %1305 = vmatprep.subr.mxu0 0.0
  %1306 = vmatpush1.msra.mxu0 0.0
  %1307 = vmatprep.subr.mxu0 0.0
  %1308 = vmatpush1.msra.mxu0 0.0
  %1309 = vmatprep.subr.mxu0 0.0
  %1310 = vmatpush1.msra.mxu0 0.0
  %1311 = vmatprep.subr.mxu0 0.0
  %1312 = vmatpush1.msra.mxu0 0.0
  %1313 = vmatprep.subr.mxu0 0.0
  %1314 = vmatpush1.msra.mxu0 0.0
  %1315 = vmatprep.subr.mxu0 0.0
  %1316 = vmatpush1.msra.mxu0 0.0
  %1317 = vmatprep.subr.mxu0 0.0
  %1318 = vmatpush1.msra.mxu0 0.0
  %1319 = vmatprep.subr.mxu0 0.0
  %1320 = vmatpush1.msra.mxu0 0.0
  %1321 = vmatprep.subr.mxu0 0.0
  %1322 = vmatpush1.msra.mxu0 0.0
  %1323 = vmatprep.subr.mxu0 0.0
  %1324 = vmatpush1.msra.mxu0 0.0
  %1325 = vmatprep.subr.mxu0 0.0
  %1326 = vmatpush1.msra.mxu0 0.0
  %1327 = vmatprep.mubr.f32.mxu0 0.0
  %1328 = vmatmul.mubr.f32.gmra.mrb[0].mxu0 %v1256
  %v1329 = vpop.f32.mrb[0].mxu0
  %v1330 = vadd.f32 %v76, %v1329
  %v1331 = vpop.f32.mrb[0].mxu0
  %v1332 = vadd.f32 %v80, %v1331
  %1333 = vdwg.mxu0
  %1334 = vmatprep.subr.mxu0 0.0
  %1335 = vmatpush1.msra.mxu0 %v21
  %1336 = vmatprep.subr.mxu0 0.0
  %1337 = vmatpush1.msra.mxu0 %v24
  %1338 = vmatprep.subr.mxu0 0.0
  %1339 = vmatpush1.msra.mxu0 %v27
  %1340 = vmatprep.subr.mxu0 0.0
  %1341 = vmatpush1.msra.mxu0 %v30
  %1342 = vmatprep.subr.mxu0 0.0
  %1343 = vmatpush1.msra.mxu0 %v33
  %1344 = vmatprep.subr.mxu0 0.0
  %1345 = vmatpush1.msra.mxu0 %v36
  %1346 = vmatprep.subr.mxu0 0.0
  %1347 = vmatpush1.msra.mxu0 %v39
  %1348 = vmatprep.subr.mxu0 0.0
  %1349 = vmatpush1.msra.mxu0 %v42
  %1350 = vmatprep.subr.mxu0 0.0
  %1351 = vmatpush1.msra.mxu0 %v45
  %1352 = vmatprep.subr.mxu0 0.0
  %1353 = vmatpush1.msra.mxu0 %v48
  %1354 = vmatprep.subr.mxu0 0.0
  %1355 = vmatpush1.msra.mxu0 %v51
  %1356 = vmatprep.subr.mxu0 0.0
  %1357 = vmatpush1.msra.mxu0 %v54
  %1358 = vmatprep.subr.mxu0 0.0
  %1359 = vmatpush1.msra.mxu0 %v57
  %1360 = vmatprep.subr.mxu0 0.0
  %1361 = vmatpush1.msra.mxu0 %v60
  %1362 = vmatprep.subr.mxu0 0.0
  %1363 = vmatpush1.msra.mxu0 %v63
  %1364 = vmatprep.subr.mxu0 0.0
  %1365 = vmatpush1.msra.mxu0 %v66
  %1366 = vmatprep.subr.mxu0 0.0
  %1367 = vmatpush1.msra.mxu0 0.0
  %1368 = vmatprep.subr.mxu0 0.0
  %1369 = vmatpush1.msra.mxu0 0.0
  %1370 = vmatprep.subr.mxu0 0.0
  %1371 = vmatpush1.msra.mxu0 0.0
  %1372 = vmatprep.subr.mxu0 0.0
  %1373 = vmatpush1.msra.mxu0 0.0
  %1374 = vmatprep.subr.mxu0 0.0
  %1375 = vmatpush1.msra.mxu0 0.0
  %1376 = vmatprep.subr.mxu0 0.0
  %1377 = vmatpush1.msra.mxu0 0.0
  %1378 = vmatprep.subr.mxu0 0.0
  %1379 = vmatpush1.msra.mxu0 0.0
  %1380 = vmatprep.subr.mxu0 0.0
  %1381 = vmatpush1.msra.mxu0 0.0
  %1382 = vmatprep.subr.mxu0 0.0
  %1383 = vmatpush1.msra.mxu0 0.0
  %1384 = vmatprep.subr.mxu0 0.0
  %1385 = vmatpush1.msra.mxu0 0.0
  %1386 = vmatprep.subr.mxu0 0.0
  %1387 = vmatpush1.msra.mxu0 0.0
  %1388 = vmatprep.subr.mxu0 0.0
  %1389 = vmatpush1.msra.mxu0 0.0
  %1390 = vmatprep.subr.mxu0 0.0
  %1391 = vmatpush1.msra.mxu0 0.0
  %1392 = vmatprep.subr.mxu0 0.0
  %1393 = vmatpush1.msra.mxu0 0.0
  %1394 = vmatprep.subr.mxu0 0.0
  %1395 = vmatpush1.msra.mxu0 0.0
  %1396 = vmatprep.subr.mxu0 0.0
  %1397 = vmatpush1.msra.mxu0 0.0
  %1398 = vmatprep.mubr.f32.mxu0 0.0
  %1399 = vmatmul.mubr.f32.gmra.mrb[0].mxu0 %v1256
  %v1400 = vpop.f32.mrb[0].mxu0
  %v1401 = vadd.f32 %v84, %v1400
  %v1402 = vpop.f32.mrb[0].mxu0
  %1403 = vdwg.mxu0
  %v1404 = vadd.f32 %v1260, %v1330
  %v1405 = vxor.u32 %v1404, 2147483648
  %v1406 = vmul.f32 %v1405, 1.442695
  %v1407 = vpow.pop %v1406
  %v1408 = vadd.f32 %v1407, 1.0
  %v1409 = vrcp.pop %v1408
  %v1410 = vmul.f32 1.0, %v1409
  %v1411 = vadd.f32 %v1261, %v1332
  %v1412 = vxor.u32 %v1411, 2147483648
  %v1413 = vmul.f32 %v1412, 1.442695
  %v1414 = vpow.pop %v1413
  %v1415 = vadd.f32 %v1414, 1.0
  %v1416 = vrcp.pop %v1415
  %v1417 = vmul.f32 1.0, %v1416
  %v1418 = vmul.f32 %v1410, %v1401
  %v1419 = vadd.f32 %v1262, %v1418
  %v1420 = vtanh.pop %v1419
  %v1421 = vsub.f32 1.0, %v1417
  %v1422 = vmul.f32 %v1421, %v1420
  %v1423 = vmul.f32 %v1417, %v1256
  %v1424 = vadd.f32 %v1422, %v1423
  %s1425 = scalar_lea.vmem %s3, 56
  %1426 = vst [vmem:[%s1425] sm:$0xff] %v1424
  %1427 = vst [vmem:[#allocation2] sm:$0xff] %v1424
  // Predicated region
  $region18: #{cudnn_gru_forward.1} parent=0 // pred_check
    _
  $region19: #{cudnn_gru_forward.1} parent=0 // pred_check_branch
    %1429 = sbr.rel (0) target = $region21
  $region20: #{cudnn_gru_forward.1} parent=0 // pred_region
    _
  $region21: #{cudnn_gru_forward.1} parent=0 // pred_fallthru
    _
  // Predicated region
  $region22: #{cudnn_gru_forward.1} parent=0 // pred_check
    _
  $region23: #{cudnn_gru_forward.1} parent=0 // pred_check_branch
    %1431 = sbr.rel (0) target = $region25
  $region24: #{cudnn_gru_forward.1} parent=0 // pred_region
    _
  $region25: #{cudnn_gru_forward.1} parent=0 // pred_fallthru
    _

</llo_original>
